<compile_context>
chip_gen: v7x
topology: tpu7x:2x2x1
jax: 0.10.0
libtpu: 0.0.40
codegen_flags: <defaults>
</compile_context>

<pallas_src>
import jax
import jax.numpy as jnp
from jax.experimental import pallas as pl
from jax.experimental.pallas import tpu as pltpu


# -----------------------------------------------------------------------------
# Kernel (one grid point = one graph)
# -----------------------------------------------------------------------------
def basegcn_kernel(xd_ref, xc_ref, adj_ref, w_ref, b_ref, out_ref):
    xd = xd_ref[0]           # [N, 128]  discrete features (cols >= ndf are 0)
    xc = xc_ref[0]           # [N, 128]  continuous features (cols >= ncf are 0)
    adj = adj_ref[0]         # [N, N]    D^{-1/2}(A+I)D^{-1/2}, f32
    bias = b_ref[...]        # [8, 128]  f32 bias slab

    def dot_w(x, k):
        # bf16 MXU operands, f32 accumulation.
        return jnp.dot(x.astype(jnp.bfloat16), w_ref[k],
                       preferred_element_type=jnp.float32)

    def relu(v):
        return jnp.maximum(v, 0.0)

    # x_d = act(embedding_d(discrete_x))          -- Linear(ndf, ndf)
    x_d = relu(dot_w(xd, 0) + bias[0])
    # x_c = act(embedding_c(continous_x))         -- CEmbedding(ncf, ncc) -> 2*ncc feats
    x_c = relu(dot_w(xc, 1) + bias[1])
    # x_g = act(embeding_g0(cat([x_d, x_c], -1))) -- concat folded into split weights
    h = relu(dot_w(x_d, 2) + dot_w(x_c, 3) + bias[2])
    # x_g = act(GCNConv1(x_g)):  A_hat @ (x_g W) + b
    h = relu(jnp.dot(adj, dot_w(h, 4), preferred_element_type=jnp.float32) + bias[3])
    # x_g = act(GCNConv2(x_g))
    h = relu(jnp.dot(adj, dot_w(h, 5), preferred_element_type=jnp.float32) + bias[4])
    # F.dropout(..., training=False): identity at inference.
    # y_predicter = PredictionLayer(H, [H], act): Linear(H,H) -> act -> Linear(H,1)
    p = relu(dot_w(h, 6) + bias[5])
    y = dot_w(p, 7) + bias[6]                   # [N, 128]; column 0 = prediction
    out_ref[0] = y


# -----------------------------------------------------------------------------
# Wrapper
# -----------------------------------------------------------------------------
@jax.jit
def basegcn_pallas(xd, xc, adj_n, w_slab, b_slab):
    B, N, F = xd.shape                          # F == 128
    out = pl.pallas_call(
        basegcn_kernel,
        out_shape=jax.ShapeDtypeStruct((B, N, 128), jnp.float32),
        grid_spec=pltpu.PrefetchScalarGridSpec(
            num_scalar_prefetch=0,
            grid=(B,),
            in_specs=[
                pl.BlockSpec((1, N, 128), lambda b: (b, 0, 0)),      # xd (per graph)
                pl.BlockSpec((1, N, 128), lambda b: (b, 0, 0)),      # xc (per graph)
                pl.BlockSpec((1, N, N), lambda b: (b, 0, 0)),        # adj (per graph)
                pl.BlockSpec((8, 128, 128), lambda b: (0, 0, 0)),    # weight slab (resident)
                pl.BlockSpec((8, 128), lambda b: (0, 0)),            # bias slab (resident)
            ],
            out_specs=pl.BlockSpec((1, N, 128), lambda b: (b, 0, 0)),
        ),
        compiler_params=pltpu.CompilerParams(
            dimension_semantics=("parallel",)),
    )(xd, xc, adj_n, w_slab, b_slab)
    return out[:, :, :1]                        # [B, N, 1]


# -----------------------------------------------------------------------------
# Deterministic parameter init (packed into two slabs) + preprocessing
# -----------------------------------------------------------------------------
def init_params(key, ndf, ncf, ncc, hidden):
    H = hidden
    ks = jax.random.split(key, 16)

    def lin_w(k, fi, fo):
        return jax.random.normal(k, (fi, fo), jnp.float32) / jnp.sqrt(float(fi))

    def lin_b(k, fo):
        return 0.01 * jax.random.normal(k, (fo,), jnp.float32)

    # embedding_d = Linear(ndf, ndf)
    wd, bd = lin_w(ks[0], ndf, ndf), lin_b(ks[1], ndf)

    # embedding_c = CEmbedding(ncf, ncc): definition not provided; nh0 = ndf + 2*ncc
    # implies it outputs 2*ncc features.  Assumed Conv1d(ncf//2, ncc, k=1) over 2
    # positions, folded into a block-diagonal [ncf, 2*ncc] matmul.
    # TODO(synk): replace with the real CEmbedding semantics.
    cin = ncf // 2
    wc_single = lin_w(ks[2], cin, ncc)
    wc = jax.scipy.linalg.block_diag(wc_single, wc_single)       # [ncf, 2*ncc]
    bc = jnp.tile(lin_b(ks[3], ncc), 2)                          # [2*ncc]

    # embeding_g0 = Linear(ndf + 2*ncc, H), split over the concat.
    w0d = lin_w(ks[4], ndf, H)
    w0c = lin_w(ks[5], 2 * ncc, H)
    b0 = lin_b(ks[6], H)

    # GCNConv(H, H): lin weight (no bias in lin) + layer bias.
    wg1, bg1 = lin_w(ks[7], H, H), lin_b(ks[8], H)
    wg2, bg2 = lin_w(ks[9], H, H), lin_b(ks[10], H)

    # PredictionLayer(H, [H], act): Linear(H,H) -> act -> Linear(H,1).
    # TODO(synk): PredictionLayer definition not provided; assumed MLP with
    #             scalar output and no terminal sigmoid (raw logits).
    wp1, bp1 = lin_w(ks[11], H, H), lin_b(ks[12], H)
    wp2, bp2 = lin_w(ks[13], H, 1), lin_b(ks[14], 1)

    def padw(w):
        out = jnp.zeros((128, 128), jnp.float32)
        return out.at[: w.shape[0], : w.shape[1]].set(w)

    def padb(b):
        out = jnp.zeros((128,), jnp.float32)
        return out.at[: b.shape[0]].set(b)

    w_slab = jnp.stack(
        [padw(w) for w in (wd, wc, w0d, w0c, wg1, wg2, wp1, wp2)]
    ).astype(jnp.bfloat16)                                        # [8, 128, 128] bf16
    b_slab = jnp.stack(
        [padb(b) for b in (bd, bc, b0, bg1, bg2, bp1, bp2,
                           jnp.zeros((1,), jnp.float32))]
    )                                                             # [8, 128] f32
    return w_slab, b_slab


def preprocess(discrete_x, continous_x, edge_index, n_nodes):
    """Pad features to 128 lanes and build the GCN-normalized dense adjacency."""
    B, N, ndf = discrete_x.shape
    ncf = continous_x.shape[-1]

    xd = jnp.zeros((B, N, 128), jnp.float32).at[:, :, :ndf].set(
        discrete_x.astype(jnp.float32))
    xc = jnp.zeros((B, N, 128), jnp.float32).at[:, :, :ncf].set(
        continous_x.astype(jnp.float32))

    # Dense adjacency adj[dst, src] with self-loops (GCNConv add_self_loops=True).
    adj = jnp.zeros((n_nodes, n_nodes), jnp.float32)
    adj = adj.at[edge_index[1], edge_index[0]].set(1.0)
    adj = adj.at[jnp.arange(n_nodes), jnp.arange(n_nodes)].set(1.0)
    # Symmetric normalization D^{-1/2}(A+I)D^{-1/2}; self-loops guarantee deg >= 1.
    deg = adj.sum(-1)
    dis = jax.lax.rsqrt(deg)
    adj_n = adj * dis[:, None] * dis[None, :]
    # Demo: same topology for every graph in the batch.
    adj_n = jnp.broadcast_to(adj_n, (B, n_nodes, n_nodes)).astype(jnp.float32)
    return xd, xc, adj_n


# -----------------------------------------------------------------------------
# Main
# -----------------------------------------------------------------------------
if __name__ == "__main__":
    # args: n_discrete_features=10, n_continous_features=12, n_channels_c=4,
    #       n_hidden=32, activation=relu, dropout (eval: no-op).  nh0 = 10 + 2*4 = 18.
    B = 4          # batch of independent graphs (grid axis)
    N = 16         # nodes per graph
    NDF = 10
    NCF = 12
    NCC = 4
    HIDDEN = 32

    key = jax.random.PRNGKey(0)
    k_d, k_c, k_p = jax.random.split(key, 3)

    discrete_x = jax.random.randint(k_d, (B, N, NDF), 0, 3).astype(jnp.float32)
    continous_x = jax.random.normal(k_c, (B, N, NCF), jnp.float32)

    # Bidirectional ring graph: 2*N edges.
    src = jnp.arange(N, dtype=jnp.int32)
    dst = (src + 1) % N
    edge_index = jnp.stack(
        [jnp.concatenate([src, dst]), jnp.concatenate([dst, src])], axis=0)

    w_slab, b_slab = init_params(k_p, NDF, NCF, NCC, HIDDEN)
    xd, xc, adj_n = preprocess(discrete_x, continous_x, edge_index, N)

    pred_y = basegcn_pallas(xd, xc, adj_n, w_slab, b_slab)
    jax.block_until_ready(pred_y)

    assert pred_y.shape == (B, N, 1)
    assert bool(jnp.all(jnp.isfinite(pred_y)))
    print("KERNEL_OK")
</pallas_src>

<mosaic_0001>
module attributes {stable_mosaic.version = 11 : i64} {
  func.func @basegcn_kernel(%arg0: i32, %arg1: memref<1x16x128xf32, #tpu.memory_space<vmem>>, %arg2: memref<1x16x128xf32, #tpu.memory_space<vmem>>, %arg3: memref<1x16x16xf32, #tpu.memory_space<vmem>>, %arg4: memref<8x128x128xbf16, #tpu.memory_space<vmem>>, %arg5: memref<8x128xf32, #tpu.memory_space<vmem>>, %arg6: memref<1x16x128xf32, #tpu.memory_space<vmem>>) attributes {dimension_semantics = [#tpu.dimension_semantics<parallel>], iteration_bounds = array<i64: 4>, scalar_prefetch = 0 : i64, scratch_operands = 0 : i64, tpu.core_type = #tpu.core_type<tc>, window_params = [{transform_indices = @transform_0, window_bounds = array<i64: 1, 16, 128>}, {transform_indices = @transform_1, window_bounds = array<i64: 1, 16, 128>}, {transform_indices = @transform_2, window_bounds = array<i64: 1, 16, 16>}, {pipeline_mode = #tpu.pipeline_mode<synchronous>, transform_indices = @transform_3, window_bounds = array<i64: 8, 128, 128>}, {pipeline_mode = #tpu.pipeline_mode<synchronous>, transform_indices = @transform_4, window_bounds = array<i64: 8, 128>}, {transform_indices = @transform_5, window_bounds = array<i64: 1, 16, 128>}]} {
    %c0 = arith.constant 0 : index
    %c0_0 = arith.constant 0 : index
    %c0_1 = arith.constant 0 : index
    %0 = vector.load %arg1[%c0, %c0_0, %c0_1] : memref<1x16x128xf32, #tpu.memory_space<vmem>>, vector<1x16x128xf32>
    %1 = vector.shape_cast %0 : vector<1x16x128xf32> to vector<16x128xf32>
    %c0_2 = arith.constant 0 : index
    %c0_3 = arith.constant 0 : index
    %c0_4 = arith.constant 0 : index
    %2 = vector.load %arg2[%c0_2, %c0_3, %c0_4] : memref<1x16x128xf32, #tpu.memory_space<vmem>>, vector<1x16x128xf32>
    %3 = vector.shape_cast %2 : vector<1x16x128xf32> to vector<16x128xf32>
    %c0_5 = arith.constant 0 : index
    %c0_6 = arith.constant 0 : index
    %c0_7 = arith.constant 0 : index
    %4 = vector.load %arg3[%c0_5, %c0_6, %c0_7] : memref<1x16x16xf32, #tpu.memory_space<vmem>>, vector<1x16x16xf32>
    %5 = vector.shape_cast %4 : vector<1x16x16xf32> to vector<16x16xf32>
    %c0_8 = arith.constant 0 : index
    %c0_9 = arith.constant 0 : index
    %6 = vector.load %arg5[%c0_8, %c0_9] : memref<8x128xf32, #tpu.memory_space<vmem>>, vector<8x128xf32>
    %7 = arith.truncf %1 : vector<16x128xf32> to vector<16x128xbf16>
    %c0_10 = arith.constant 0 : index
    %c0_11 = arith.constant 0 : index
    %c0_12 = arith.constant 0 : index
    %8 = vector.load %arg4[%c0_10, %c0_11, %c0_12] : memref<8x128x128xbf16, #tpu.memory_space<vmem>>, vector<1x128x128xbf16>
    %9 = vector.shape_cast %8 : vector<1x128x128xbf16> to vector<128x128xbf16>
    %cst = arith.constant dense<0.000000e+00> : vector<16x128xf32>
    %10 = tpu.matmul %7, %9, %cst {dimension_numbers = #tpu.dot_dimension_numbers<[1], [0], [0], [1], [0, 0, 1, 1], [], []>} : vector<16x128xbf16>, vector<128x128xbf16>, vector<16x128xf32> -> vector<16x128xf32>
    %11 = vector.extract_strided_slice %6 {offsets = [0, 0], sizes = [1, 128], strides = [1, 1]} : vector<8x128xf32> to vector<1x128xf32>
    %12 = vector.shape_cast %11 : vector<1x128xf32> to vector<128xf32>
    %13 = vector.shape_cast %12 : vector<128xf32> to vector<1x128xf32>
    %14 = vector.broadcast %13 : vector<1x128xf32> to vector<16x128xf32>
    %15 = arith.addf %10, %14 : vector<16x128xf32>
    %cst_13 = arith.constant 0.000000e+00 : f32
    %16 = vector.broadcast %cst_13 : f32 to vector<16x128xf32>
    %17 = arith.maximumf %15, %16 : vector<16x128xf32>
    %18 = arith.truncf %3 : vector<16x128xf32> to vector<16x128xbf16>
    %c1 = arith.constant 1 : index
    %c0_14 = arith.constant 0 : index
    %c0_15 = arith.constant 0 : index
    %19 = vector.load %arg4[%c1, %c0_14, %c0_15] : memref<8x128x128xbf16, #tpu.memory_space<vmem>>, vector<1x128x128xbf16>
    %20 = vector.shape_cast %19 : vector<1x128x128xbf16> to vector<128x128xbf16>
    %cst_16 = arith.constant dense<0.000000e+00> : vector<16x128xf32>
    %21 = tpu.matmul %18, %20, %cst_16 {dimension_numbers = #tpu.dot_dimension_numbers<[1], [0], [0], [1], [0, 0, 1, 1], [], []>} : vector<16x128xbf16>, vector<128x128xbf16>, vector<16x128xf32> -> vector<16x128xf32>
    %22 = vector.extract_strided_slice %6 {offsets = [1, 0], sizes = [1, 128], strides = [1, 1]} : vector<8x128xf32> to vector<1x128xf32>
    %23 = vector.shape_cast %22 : vector<1x128xf32> to vector<128xf32>
    %24 = vector.shape_cast %23 : vector<128xf32> to vector<1x128xf32>
    %25 = vector.broadcast %24 : vector<1x128xf32> to vector<16x128xf32>
    %26 = arith.addf %21, %25 : vector<16x128xf32>
    %cst_17 = arith.constant 0.000000e+00 : f32
    %27 = vector.broadcast %cst_17 : f32 to vector<16x128xf32>
    %28 = arith.maximumf %26, %27 : vector<16x128xf32>
    %29 = arith.truncf %17 : vector<16x128xf32> to vector<16x128xbf16>
    %c2 = arith.constant 2 : index
    %c0_18 = arith.constant 0 : index
    %c0_19 = arith.constant 0 : index
    %30 = vector.load %arg4[%c2, %c0_18, %c0_19] : memref<8x128x128xbf16, #tpu.memory_space<vmem>>, vector<1x128x128xbf16>
    %31 = vector.shape_cast %30 : vector<1x128x128xbf16> to vector<128x128xbf16>
    %cst_20 = arith.constant dense<0.000000e+00> : vector<16x128xf32>
    %32 = tpu.matmul %29, %31, %cst_20 {dimension_numbers = #tpu.dot_dimension_numbers<[1], [0], [0], [1], [0, 0, 1, 1], [], []>} : vector<16x128xbf16>, vector<128x128xbf16>, vector<16x128xf32> -> vector<16x128xf32>
    %33 = arith.truncf %28 : vector<16x128xf32> to vector<16x128xbf16>
    %c3 = arith.constant 3 : index
    %c0_21 = arith.constant 0 : index
    %c0_22 = arith.constant 0 : index
    %34 = vector.load %arg4[%c3, %c0_21, %c0_22] : memref<8x128x128xbf16, #tpu.memory_space<vmem>>, vector<1x128x128xbf16>
    %35 = vector.shape_cast %34 : vector<1x128x128xbf16> to vector<128x128xbf16>
    %cst_23 = arith.constant dense<0.000000e+00> : vector<16x128xf32>
    %36 = tpu.matmul %33, %35, %cst_23 {dimension_numbers = #tpu.dot_dimension_numbers<[1], [0], [0], [1], [0, 0, 1, 1], [], []>} : vector<16x128xbf16>, vector<128x128xbf16>, vector<16x128xf32> -> vector<16x128xf32>
    %37 = arith.addf %32, %36 : vector<16x128xf32>
    %38 = vector.extract_strided_slice %6 {offsets = [2, 0], sizes = [1, 128], strides = [1, 1]} : vector<8x128xf32> to vector<1x128xf32>
    %39 = vector.shape_cast %38 : vector<1x128xf32> to vector<128xf32>
    %40 = vector.shape_cast %39 : vector<128xf32> to vector<1x128xf32>
    %41 = vector.broadcast %40 : vector<1x128xf32> to vector<16x128xf32>
    %42 = arith.addf %37, %41 : vector<16x128xf32>
    %cst_24 = arith.constant 0.000000e+00 : f32
    %43 = vector.broadcast %cst_24 : f32 to vector<16x128xf32>
    %44 = arith.maximumf %42, %43 : vector<16x128xf32>
    %45 = arith.truncf %44 : vector<16x128xf32> to vector<16x128xbf16>
    %c4 = arith.constant 4 : index
    %c0_25 = arith.constant 0 : index
    %c0_26 = arith.constant 0 : index
    %46 = vector.load %arg4[%c4, %c0_25, %c0_26] : memref<8x128x128xbf16, #tpu.memory_space<vmem>>, vector<1x128x128xbf16>
    %47 = vector.shape_cast %46 : vector<1x128x128xbf16> to vector<128x128xbf16>
    %cst_27 = arith.constant dense<0.000000e+00> : vector<16x128xf32>
    %48 = tpu.matmul %45, %47, %cst_27 {dimension_numbers = #tpu.dot_dimension_numbers<[1], [0], [0], [1], [0, 0, 1, 1], [], []>} : vector<16x128xbf16>, vector<128x128xbf16>, vector<16x128xf32> -> vector<16x128xf32>
    %cst_28 = arith.constant dense<0.000000e+00> : vector<16x128xf32>
    %49 = tpu.matmul %5, %48, %cst_28 {dimension_numbers = #tpu.dot_dimension_numbers<[1], [0], [0], [1], [0, 0, 1, 1], [], []>} : vector<16x16xf32>, vector<16x128xf32>, vector<16x128xf32> -> vector<16x128xf32>
    %50 = vector.extract_strided_slice %6 {offsets = [3, 0], sizes = [1, 128], strides = [1, 1]} : vector<8x128xf32> to vector<1x128xf32>
    %51 = vector.shape_cast %50 : vector<1x128xf32> to vector<128xf32>
    %52 = vector.shape_cast %51 : vector<128xf32> to vector<1x128xf32>
    %53 = vector.broadcast %52 : vector<1x128xf32> to vector<16x128xf32>
    %54 = arith.addf %49, %53 : vector<16x128xf32>
    %cst_29 = arith.constant 0.000000e+00 : f32
    %55 = vector.broadcast %cst_29 : f32 to vector<16x128xf32>
    %56 = arith.maximumf %54, %55 : vector<16x128xf32>
    %57 = arith.truncf %56 : vector<16x128xf32> to vector<16x128xbf16>
    %c5 = arith.constant 5 : index
    %c0_30 = arith.constant 0 : index
    %c0_31 = arith.constant 0 : index
    %58 = vector.load %arg4[%c5, %c0_30, %c0_31] : memref<8x128x128xbf16, #tpu.memory_space<vmem>>, vector<1x128x128xbf16>
    %59 = vector.shape_cast %58 : vector<1x128x128xbf16> to vector<128x128xbf16>
    %cst_32 = arith.constant dense<0.000000e+00> : vector<16x128xf32>
    %60 = tpu.matmul %57, %59, %cst_32 {dimension_numbers = #tpu.dot_dimension_numbers<[1], [0], [0], [1], [0, 0, 1, 1], [], []>} : vector<16x128xbf16>, vector<128x128xbf16>, vector<16x128xf32> -> vector<16x128xf32>
    %cst_33 = arith.constant dense<0.000000e+00> : vector<16x128xf32>
    %61 = tpu.matmul %5, %60, %cst_33 {dimension_numbers = #tpu.dot_dimension_numbers<[1], [0], [0], [1], [0, 0, 1, 1], [], []>} : vector<16x16xf32>, vector<16x128xf32>, vector<16x128xf32> -> vector<16x128xf32>
    %62 = vector.extract_strided_slice %6 {offsets = [4, 0], sizes = [1, 128], strides = [1, 1]} : vector<8x128xf32> to vector<1x128xf32>
    %63 = vector.shape_cast %62 : vector<1x128xf32> to vector<128xf32>
    %64 = vector.shape_cast %63 : vector<128xf32> to vector<1x128xf32>
    %65 = vector.broadcast %64 : vector<1x128xf32> to vector<16x128xf32>
    %66 = arith.addf %61, %65 : vector<16x128xf32>
    %cst_34 = arith.constant 0.000000e+00 : f32
    %67 = vector.broadcast %cst_34 : f32 to vector<16x128xf32>
    %68 = arith.maximumf %66, %67 : vector<16x128xf32>
    %69 = arith.truncf %68 : vector<16x128xf32> to vector<16x128xbf16>
    %c6 = arith.constant 6 : index
    %c0_35 = arith.constant 0 : index
    %c0_36 = arith.constant 0 : index
    %70 = vector.load %arg4[%c6, %c0_35, %c0_36] : memref<8x128x128xbf16, #tpu.memory_space<vmem>>, vector<1x128x128xbf16>
    %71 = vector.shape_cast %70 : vector<1x128x128xbf16> to vector<128x128xbf16>
    %cst_37 = arith.constant dense<0.000000e+00> : vector<16x128xf32>
    %72 = tpu.matmul %69, %71, %cst_37 {dimension_numbers = #tpu.dot_dimension_numbers<[1], [0], [0], [1], [0, 0, 1, 1], [], []>} : vector<16x128xbf16>, vector<128x128xbf16>, vector<16x128xf32> -> vector<16x128xf32>
    %73 = vector.extract_strided_slice %6 {offsets = [5, 0], sizes = [1, 128], strides = [1, 1]} : vector<8x128xf32> to vector<1x128xf32>
    %74 = vector.shape_cast %73 : vector<1x128xf32> to vector<128xf32>
    %75 = vector.shape_cast %74 : vector<128xf32> to vector<1x128xf32>
    %76 = vector.broadcast %75 : vector<1x128xf32> to vector<16x128xf32>
    %77 = arith.addf %72, %76 : vector<16x128xf32>
    %cst_38 = arith.constant 0.000000e+00 : f32
    %78 = vector.broadcast %cst_38 : f32 to vector<16x128xf32>
    %79 = arith.maximumf %77, %78 : vector<16x128xf32>
    %80 = arith.truncf %79 : vector<16x128xf32> to vector<16x128xbf16>
    %c7 = arith.constant 7 : index
    %c0_39 = arith.constant 0 : index
    %c0_40 = arith.constant 0 : index
    %81 = vector.load %arg4[%c7, %c0_39, %c0_40] : memref<8x128x128xbf16, #tpu.memory_space<vmem>>, vector<1x128x128xbf16>
    %82 = vector.shape_cast %81 : vector<1x128x128xbf16> to vector<128x128xbf16>
    %cst_41 = arith.constant dense<0.000000e+00> : vector<16x128xf32>
    %83 = tpu.matmul %80, %82, %cst_41 {dimension_numbers = #tpu.dot_dimension_numbers<[1], [0], [0], [1], [0, 0, 1, 1], [], []>} : vector<16x128xbf16>, vector<128x128xbf16>, vector<16x128xf32> -> vector<16x128xf32>
    %84 = vector.extract_strided_slice %6 {offsets = [6, 0], sizes = [1, 128], strides = [1, 1]} : vector<8x128xf32> to vector<1x128xf32>
    %85 = vector.shape_cast %84 : vector<1x128xf32> to vector<128xf32>
    %86 = vector.shape_cast %85 : vector<128xf32> to vector<1x128xf32>
    %87 = vector.broadcast %86 : vector<1x128xf32> to vector<16x128xf32>
    %88 = arith.addf %83, %87 : vector<16x128xf32>
    %c0_42 = arith.constant 0 : index
    %c0_43 = arith.constant 0 : index
    %c0_44 = arith.constant 0 : index
    %89 = vector.load %arg6[%c0_42, %c0_43, %c0_44] : memref<1x16x128xf32, #tpu.memory_space<vmem>>, vector<1x16x128xf32>
    %90 = vector.shape_cast %89 : vector<1x16x128xf32> to vector<16x128xf32>
    %91 = vector.shape_cast %88 : vector<16x128xf32> to vector<1x16x128xf32>
    tpu.vector_store %arg6[%c0_42, %c0_43, %c0_44], %91 {strides = array<i32>} : memref<1x16x128xf32, #tpu.memory_space<vmem>>, vector<1x16x128xf32>,
    return
  }
  func.func @transform_0(%arg0: i32) -> (i32, i32, i32) {
    %c0_i32 = arith.constant 0 : i32
    %c0_i32_0 = arith.constant 0 : i32
    %c0_i32_1 = arith.constant 0 : i32
    return %arg0, %c0_i32, %c0_i32_0 : i32, i32, i32
  }
  func.func @transform_1(%arg0: i32) -> (i32, i32, i32) {
    %c0_i32 = arith.constant 0 : i32
    %c0_i32_0 = arith.constant 0 : i32
    %c0_i32_1 = arith.constant 0 : i32
    return %arg0, %c0_i32, %c0_i32_0 : i32, i32, i32
  }
  func.func @transform_2(%arg0: i32) -> (i32, i32, i32) {
    %c0_i32 = arith.constant 0 : i32
    %c0_i32_0 = arith.constant 0 : i32
    %c0_i32_1 = arith.constant 0 : i32
    return %arg0, %c0_i32, %c0_i32_0 : i32, i32, i32
  }
  func.func @transform_3(%arg0: i32) -> (i32, i32, i32) {
    %c0_i32 = arith.constant 0 : i32
    %c0_i32_0 = arith.constant 0 : i32
    %c0_i32_1 = arith.constant 0 : i32
    %c0_i32_2 = arith.constant 0 : i32
    return %c0_i32, %c0_i32_0, %c0_i32_1 : i32, i32, i32
  }
  func.func @transform_4(%arg0: i32) -> (i32, i32) {
    %c0_i32 = arith.constant 0 : i32
    %c0_i32_0 = arith.constant 0 : i32
    %c0_i32_1 = arith.constant 0 : i32
    return %c0_i32, %c0_i32_0 : i32, i32
  }
  func.func @transform_5(%arg0: i32) -> (i32, i32, i32) {
    %c0_i32 = arith.constant 0 : i32
    %c0_i32_0 = arith.constant 0 : i32
    %c0_i32_1 = arith.constant 0 : i32
    return %arg0, %c0_i32, %c0_i32_0 : i32, i32, i32
  }
}

</mosaic_0001>

<llo_original>
// kernel: basegcn_pallas.1
$region0: #{basegcn_pallas.1}
  #allocation0 [shape = 'u32[]', space=smem, size = 0x4, offset = 0x4, fixed_abs, tag = 'smem constant byte address 0x4 - core index']
  #allocation1 [shape = 'u32[144,128]{1,0:T(1,128)}', space=vmem, size = 0x12000, scoped, tag = 'internal scratch']
  %s0 = inlined_call_operand.hbm [shape: f32[4,16,128], index: 0, kind: input, shape index: {}]
  %s1 = inlined_call_operand.hbm [shape: f32[4,16,128], index: 1, kind: input, shape index: {}]
  %s2 = inlined_call_operand.hbm [shape: f32[4,16,16], index: 2, kind: input, shape index: {}]
  %s3 = inlined_call_operand.hbm [shape: bf16[8,128,128], index: 3, kind: input, shape index: {}]
  %s4 = inlined_call_operand.vmem [shape: f32[8,128], index: 4, kind: input, shape index: {}]
  %s5 = inlined_call_operand.vmem [shape: f32[4,16,128], index: 5, kind: output, shape index: {}]
  %s6 = sld [smem:[#allocation0]]
  $region69: #{basegcn_pallas.1} parent=0
    _
  %s8 = ssub.s32 1, %s6
  %s9 = scalar_select 0, %s8, %s6
  $region1: #{basegcn_pallas.1} parent=0
    #allocation2 [shape = 'u8[16384]{0}', space=vmem, size = 0x4000, scoped, tag = 'input window, operand 0']
    #allocation3 [shape = 's32[2]{0}', space=sflag, size = 0x8, scoped, tag = 'scoped memory for basegcn_pallas.1']
    #allocation4 [shape = 'u8[16384]{0}', space=vmem, size = 0x4000, scoped, tag = 'input window, operand 1']
    #allocation5 [shape = 's32[2]{0}', space=sflag, size = 0x8, scoped, tag = 'scoped memory for basegcn_pallas.1']
    #allocation6 [shape = 'u8[16384]{0}', space=vmem, size = 0x4000, scoped, tag = 'input window, operand 2']
    #allocation7 [shape = 'u8[262144]{0}', space=vmem, size = 0x40000, scoped, tag = 'input window, operand 3, single buffered']
    #allocation8 [shape = 's32[1]{0}', space=sflag, size = 0x4, scoped, tag = 'scoped memory for basegcn_pallas.1']
    %10 = vsyncpa [#allocation3], 0
    %s11 = scalar_lea.sflag [#allocation3], 1
    %12 = vsyncpa %s11, 0
    %13 = vsyncpa [#allocation5], 0
    %s14 = scalar_lea.sflag [#allocation5], 1
    %15 = vsyncpa %s14, 0
    %16 = vsyncpa [#allocation8], 0
    loop: start=0, step=1, limit=6
    $region2: #{basegcn_pallas.1} parent=1 // loop_pre_header
      _
    $region3: #{basegcn_pallas.1} parent=1 // loop_header
      %s18 = sphi 0, %s22
      %p19 = scmp.ge.s32.totalorder %s18, 6
      %s28 = sphi 0, %s30
      %s31 = sphi 0, %s28
      %s32 = sphi 0, %s31
      %s48 = sphi 0, %s32
      %s54 = sphi 0, %s56
      %s57 = sphi 0, %s54
      %s58 = sphi 0, %s57
      %s74 = sphi 0, %s58
      %s80 = sphi 0, %s82
      %s83 = sphi 0, %s80
      %s84 = sphi 0, %s83
      %s100 = sphi 0, %s84
      %s104 = sphi 0, %s104
      %s106 = sphi 0, %s104
      %s107 = sphi 0, %s106
      %s121 = sphi 0, %s107
      %s125 = sphi 0, %s125
      %s127 = sphi 0, %s125
      %s128 = sphi 0, %s127
      %s142 = sphi 0, %s128
      %s148 = sphi 0, %s150
      %s151 = sphi 0, %s148
      %s152 = sphi 0, %s151
      %s168 = sphi 0, %s152
    $region4: #{basegcn_pallas.1} parent=1 // loop_header_branch
      %21 = sbr.rel (%p19) target = $region8
    $region5: #{basegcn_pallas.1} parent=1 // loop_body
      %s23 = ssub.s32 %s18, 1
      %s24 = ssub.s32 %s18, 2
      %s25 = sadd.s32 %s18, 1
      %s26 = ssub.s32 %s18, %s25
      %p27 = scmp.eq.s32.totalorder %s26, 0
      %s29 = sadd.s32 %s28, 1
      %s30 = scalar_select %p27, %s28, %s29
      %p33 = pneg %p27
      %p34 = scmp.eq.s32.totalorder %s18, 3
      %p35 = por %p33, %p34
      %p36 = scmp.ne.s32.totalorder %s28, %s31
      %p37 = scmp.eq.s32.totalorder %s18, 0
      %p38 = por %p36, %p37
      %p39 = scmp.ne.s32.totalorder %s28, %s31
      %p40 = scmp.eq.s32.totalorder %s23, 3
      %p41 = por %p39, %p40
      %p42 = scmp.ne.s32.totalorder %s31, %s32
      %p43 = scmp.eq.s32.totalorder %s23, 0
      %p44 = por %p42, %p43
      %p45 = scmp.ne.s32.totalorder %s31, %s32
      %p46 = scmp.eq.s32.totalorder %s24, 3
      %p47 = por %p45, %p46
      %p49 = scmp.ne.s32.totalorder %s32, %s48
      %p50 = scmp.eq.s32.totalorder %s24, 0
      %p51 = por %p49, %p50
      %s52 = ssub.s32 %s18, %s25
      %p53 = scmp.eq.s32.totalorder %s52, 0
      %s55 = sadd.s32 %s54, 1
      %s56 = scalar_select %p53, %s54, %s55
      %p59 = pneg %p53
      %p60 = scmp.eq.s32.totalorder %s18, 3
      %p61 = por %p59, %p60
      %p62 = scmp.ne.s32.totalorder %s54, %s57
      %p63 = scmp.eq.s32.totalorder %s18, 0
      %p64 = por %p62, %p63
      %p65 = scmp.ne.s32.totalorder %s54, %s57
      %p66 = scmp.eq.s32.totalorder %s23, 3
      %p67 = por %p65, %p66
      %p68 = scmp.ne.s32.totalorder %s57, %s58
      %p69 = scmp.eq.s32.totalorder %s23, 0
      %p70 = por %p68, %p69
      %p71 = scmp.ne.s32.totalorder %s57, %s58
      %p72 = scmp.eq.s32.totalorder %s24, 3
      %p73 = por %p71, %p72
      %p75 = scmp.ne.s32.totalorder %s58, %s74
      %p76 = scmp.eq.s32.totalorder %s24, 0
      %p77 = por %p75, %p76
      %s78 = ssub.s32 %s18, %s25
      %p79 = scmp.eq.s32.totalorder %s78, 0
      %s81 = sadd.s32 %s80, 1
      %s82 = scalar_select %p79, %s80, %s81
      %p85 = pneg %p79
      %p86 = scmp.eq.s32.totalorder %s18, 3
      %p87 = por %p85, %p86
      %p88 = scmp.ne.s32.totalorder %s80, %s83
      %p89 = scmp.eq.s32.totalorder %s18, 0
      %p90 = por %p88, %p89
      %p91 = scmp.ne.s32.totalorder %s80, %s83
      %p92 = scmp.eq.s32.totalorder %s23, 3
      %p93 = por %p91, %p92
      %p94 = scmp.ne.s32.totalorder %s83, %s84
      %p95 = scmp.eq.s32.totalorder %s23, 0
      %p96 = por %p94, %p95
      %p97 = scmp.ne.s32.totalorder %s83, %s84
      %p98 = scmp.eq.s32.totalorder %s24, 3
      %p99 = por %p97, %p98
      %p101 = scmp.ne.s32.totalorder %s84, %s100
      %p102 = scmp.eq.s32.totalorder %s24, 0
      %p103 = por %p101, %p102
      %s105 = sadd.s32 %s104, 1
      %p108 = scmp.eq.s32.totalorder %s18, 3
      %p109 = scmp.ne.s32.totalorder %s104, %s106
      %p110 = scmp.eq.s32.totalorder %s18, 0
      %p111 = por %p109, %p110
      %p112 = scmp.ne.s32.totalorder %s104, %s106
      %p113 = scmp.eq.s32.totalorder %s23, 3
      %p114 = por %p112, %p113
      %p115 = scmp.ne.s32.totalorder %s106, %s107
      %p116 = scmp.eq.s32.totalorder %s23, 0
      %p117 = por %p115, %p116
      %p118 = scmp.ne.s32.totalorder %s106, %s107
      %p119 = scmp.eq.s32.totalorder %s24, 3
      %p120 = por %p118, %p119
      %p122 = scmp.ne.s32.totalorder %s107, %s121
      %p123 = scmp.eq.s32.totalorder %s24, 0
      %p124 = por %p122, %p123
      %s126 = sadd.s32 %s125, 1
      %p129 = scmp.eq.s32.totalorder %s18, 3
      %p130 = scmp.ne.s32.totalorder %s125, %s127
      %p131 = scmp.eq.s32.totalorder %s18, 0
      %p132 = por %p130, %p131
      %p133 = scmp.ne.s32.totalorder %s125, %s127
      %p134 = scmp.eq.s32.totalorder %s23, 3
      %p135 = por %p133, %p134
      %p136 = scmp.ne.s32.totalorder %s127, %s128
      %p137 = scmp.eq.s32.totalorder %s23, 0
      %p138 = por %p136, %p137
      %p139 = scmp.ne.s32.totalorder %s127, %s128
      %p140 = scmp.eq.s32.totalorder %s24, 3
      %p141 = por %p139, %p140
      %p143 = scmp.ne.s32.totalorder %s128, %s142
      %p144 = scmp.eq.s32.totalorder %s24, 0
      %p145 = por %p143, %p144
      %s146 = ssub.s32 %s18, %s25
      %p147 = scmp.eq.s32.totalorder %s146, 0
      %s149 = sadd.s32 %s148, 1
      %s150 = scalar_select %p147, %s148, %s149
      %p153 = pneg %p147
      %p154 = scmp.eq.s32.totalorder %s18, 3
      %p155 = por %p153, %p154
      %p156 = scmp.ne.s32.totalorder %s148, %s151
      %p157 = scmp.eq.s32.totalorder %s18, 0
      %p158 = por %p156, %p157
      %p159 = scmp.ne.s32.totalorder %s148, %s151
      %p160 = scmp.eq.s32.totalorder %s23, 3
      %p161 = por %p159, %p160
      %p162 = scmp.ne.s32.totalorder %s151, %s152
      %p163 = scmp.eq.s32.totalorder %s23, 0
      %p164 = por %p162, %p163
      %p165 = scmp.ne.s32.totalorder %s151, %s152
      %p166 = scmp.eq.s32.totalorder %s24, 3
      %p167 = por %p165, %p166
      %p169 = scmp.ne.s32.totalorder %s152, %s168
      %p170 = scmp.eq.s32.totalorder %s24, 0
      %p171 = por %p169, %p170
      %p172 = scmp.le.s32.totalorder 1, %s18
      %p173 = scmp.lt.s32.totalorder %s18, 5
      %p174 = pnand %p172, %p173
      %p175 = pneg %p174
      // Predicated region
      $region9: #{basegcn_pallas.1} parent=5 // pred_check
        _
      $region10: #{basegcn_pallas.1} parent=5 // pred_check_branch
        %177 = sbr.rel (%p174) target = $region12
      $region11: #{basegcn_pallas.1} parent=5 // pred_region
        %s178 = ssub.s32 %s18, 1
        // Predicated region
        $region13: #{basegcn_pallas.1} parent=11 // pred_check
          %p179 = pneg %p117
        $region14: #{basegcn_pallas.1} parent=11 // pred_check_branch
          %181 = sbr.rel (%p179) target = $region16
        $region15: #{basegcn_pallas.1} parent=11 // pred_region
          %s183 = ssub.s32 8192, 8192
          %184 = vsyncadd [#allocation8], %s183
          %s185 = sshll.u32 [#allocation7], 4
          %s186 = int_to_ptr.vmem [resolvable:$true] %s185
          %191 = dma.hbm_to_vmem [thread:$0]  %s3, 8192, %s186, [#allocation8], 64, 64, 4
        $region16: #{basegcn_pallas.1} parent=11 // pred_fallthru
          _
        // Predicated region
        $region17: #{basegcn_pallas.1} parent=11 // pred_check
          %p192 = pneg %p138
        $region18: #{basegcn_pallas.1} parent=11 // pred_check_branch
          %194 = sbr.rel (%p192) target = $region20
        $region19: #{basegcn_pallas.1} parent=11 // pred_region
          _
        $region20: #{basegcn_pallas.1} parent=11 // pred_fallthru
          _
      $region12: #{basegcn_pallas.1} parent=5 // pred_fallthru
        _
      %p195 = scmp.lt.s32.totalorder %s18, 4
      // Predicated region
      $region21: #{basegcn_pallas.1} parent=5 // pred_check
        %p196 = pneg %p195
      $region22: #{basegcn_pallas.1} parent=5 // pred_check_branch
        %198 = sbr.rel (%p196) target = $region24
      $region23: #{basegcn_pallas.1} parent=5 // pred_region
        // Predicated region
        $region25: #{basegcn_pallas.1} parent=23 // pred_check
          %p199 = pneg %p38
        $region26: #{basegcn_pallas.1} parent=23 // pred_check_branch
          %201 = sbr.rel (%p199) target = $region28
        $region27: #{basegcn_pallas.1} parent=23 // pred_region
          %s202 = sand.u32 %s28, 1
          %s203 = scalar_lea.sflag [#allocation3], %s202
          %s204 = sand.u32 %s28, 1
          %s205 = smul.addr %s204, 16
          %s206 = scalar_lea.vmem [#allocation2], %s205
          %s208 = ssub.s32 256, 256
          %209 = vsyncadd %s203, %s208
          %s210 = smul.addr %s18, 2
          %s211 = smul.addr %s210, 128
          %s212 = scalar_lea.hbm %s0, %s211
          %s213 = sshll.u32 %s206, 4
          %s214 = int_to_ptr.vmem [resolvable:$true] %s213
          %219 = dma.hbm_to_vmem [thread:$0]  %s212, 256, %s214, %s203, 128, 128, 8
        $region28: #{basegcn_pallas.1} parent=23 // pred_fallthru
          _
        // Predicated region
        $region29: #{basegcn_pallas.1} parent=23 // pred_check
          %p220 = pneg %p64
        $region30: #{basegcn_pallas.1} parent=23 // pred_check_branch
          %222 = sbr.rel (%p220) target = $region32
        $region31: #{basegcn_pallas.1} parent=23 // pred_region
          %s223 = sand.u32 %s18, 1
          %s224 = scalar_lea.sflag [#allocation5], %s223
          %s225 = sand.u32 %s54, 1
          %s226 = smul.addr %s225, 16
          %s227 = scalar_lea.vmem [#allocation4], %s226
          %s229 = ssub.s32 256, 256
          %230 = vsyncadd %s224, %s229
          %s231 = smul.addr %s18, 2
          %s232 = smul.addr %s231, 128
          %s233 = scalar_lea.hbm %s1, %s232
          %s234 = sshll.u32 %s227, 4
          %s235 = int_to_ptr.vmem [resolvable:$true] %s234
          %240 = dma.hbm_to_vmem [thread:$0]  %s233, 256, %s235, %s224, 128, 128, 8
        $region32: #{basegcn_pallas.1} parent=23 // pred_fallthru
          _
        // Predicated region
        $region33: #{basegcn_pallas.1} parent=23 // pred_check
          %p241 = pneg %p90
        $region34: #{basegcn_pallas.1} parent=23 // pred_check_branch
          %243 = sbr.rel (%p241) target = $region36
        $region35: #{basegcn_pallas.1} parent=23 // pred_region
          %s244 = sand.u32 %s18, 1
          %s245 = scalar_lea.sflag [#allocation5], %s244
          %s246 = sand.u32 %s80, 1
          %s247 = smul.addr %s246, 16
          %s248 = scalar_lea.vmem [#allocation6], %s247
          %s250 = ssub.s32 256, 256
          %251 = vsyncadd %s245, %s250
          %s252 = smul.addr %s18, 2
          %s253 = smul.addr %s252, 128
          %s254 = scalar_lea.hbm %s2, %s253
          %s255 = sshll.u32 %s248, 4
          %s256 = int_to_ptr.vmem [resolvable:$true] %s255
          %261 = dma.hbm_to_vmem [thread:$0]  %s254, 256, %s256, %s245, 128, 128, 8
        $region36: #{basegcn_pallas.1} parent=23 // pred_fallthru
          _
      $region24: #{basegcn_pallas.1} parent=5 // pred_fallthru
        _
      %p262 = scmp.le.s32.totalorder 1, %s18
      %p263 = scmp.lt.s32.totalorder %s18, 5
      %p264 = pnand %p262, %p263
      %p265 = pneg %p264
      // Predicated region
      $region37: #{basegcn_pallas.1} parent=5 // pred_check
        _
      $region38: #{basegcn_pallas.1} parent=5 // pred_check_branch
        %267 = sbr.rel (%p264) target = $region40
      $region39: #{basegcn_pallas.1} parent=5 // pred_region
        %s268 = ssub.s32 %s18, 1
        %s269 = sand.u32 %s31, 1
        %s270 = scalar_lea.sflag [#allocation3], %s269
        %s271 = sand.u32 %s31, 1
        %s272 = smul.addr %s271, 16
        %s273 = scalar_lea.vmem [#allocation2], %s272
        // Predicated region
        $region41: #{basegcn_pallas.1} parent=39 // pred_check
          %p274 = pneg %p44
        $region42: #{basegcn_pallas.1} parent=39 // pred_check_branch
          %276 = sbr.rel (%p274) target = $region44
        $region43: #{basegcn_pallas.1} parent=39 // pred_region
          %277 = dma.done %s270, 256
        $region44: #{basegcn_pallas.1} parent=39 // pred_fallthru
          _
        %s278 = sand.u32 %s23, 1
        %s279 = scalar_lea.sflag [#allocation5], %s278
        %s280 = sand.u32 %s57, 1
        %s281 = smul.addr %s280, 16
        %s282 = scalar_lea.vmem [#allocation4], %s281
        // Predicated region
        $region45: #{basegcn_pallas.1} parent=39 // pred_check
          %p283 = pneg %p70
        $region46: #{basegcn_pallas.1} parent=39 // pred_check_branch
          %285 = sbr.rel (%p283) target = $region48
        $region47: #{basegcn_pallas.1} parent=39 // pred_region
          %286 = dma.done %s279, 256
        $region48: #{basegcn_pallas.1} parent=39 // pred_fallthru
          _
        %s287 = sand.u32 %s23, 1
        %s288 = scalar_lea.sflag [#allocation5], %s287
        %s289 = sand.u32 %s83, 1
        %s290 = smul.addr %s289, 16
        %s291 = scalar_lea.vmem [#allocation6], %s290
        // Predicated region
        $region49: #{basegcn_pallas.1} parent=39 // pred_check
          %p292 = pneg %p96
        $region50: #{basegcn_pallas.1} parent=39 // pred_check_branch
          %294 = sbr.rel (%p292) target = $region52
        $region51: #{basegcn_pallas.1} parent=39 // pred_region
          %295 = dma.done %s288, 256
        $region52: #{basegcn_pallas.1} parent=39 // pred_fallthru
          _
        // Predicated region
        $region53: #{basegcn_pallas.1} parent=39 // pred_check
          %p296 = pneg %p117
        $region54: #{basegcn_pallas.1} parent=39 // pred_check_branch
          %298 = sbr.rel (%p296) target = $region56
        $region55: #{basegcn_pallas.1} parent=39 // pred_region
          %299 = dma.done [#allocation8], 8192
        $region56: #{basegcn_pallas.1} parent=39 // pred_fallthru
          _
        %s300 = sand.u32 %s31, 1
        %s301 = scalar_lea.sflag [#allocation3], %s300
        %s302 = sand.u32 %s31, 1
        %s303 = smul.addr %s302, 16
        %s304 = scalar_lea.vmem [#allocation2], %s303
        %p305 = pneg %p44
        %p306 = pneg %p41
        %s307 = sand.u32 %s23, 1
        %s308 = scalar_lea.sflag [#allocation5], %s307
        %s309 = sand.u32 %s57, 1
        %s310 = smul.addr %s309, 16
        %s311 = scalar_lea.vmem [#allocation4], %s310
        %p312 = pneg %p70
        %p313 = pneg %p67
        %s314 = sand.u32 %s23, 1
        %s315 = scalar_lea.sflag [#allocation5], %s314
        %s316 = sand.u32 %s83, 1
        %s317 = smul.addr %s316, 16
        %s318 = scalar_lea.vmem [#allocation6], %s317
        %p319 = pneg %p96
        %p320 = pneg %p93
        %p321 = pneg %p117
        %p322 = pneg %p114
        %p323 = pneg %p138
        %p324 = pneg %p135
        %p325 = pneg %p164
        %p326 = pneg %p161
        %p327 = scmp.lt.s32.totalorder %s23, 3
        %s328 = scalar_select %p327, %s23, 3
        %s329 = smul.addr %s328, 2
        %s330 = smul.addr %s329, 8
        %s331 = scalar_lea.vmem %s5, %s330
        %p332 = scmp.lt.s32.totalorder %s23, 3
        %s333 = scalar_select %p332, %s23, 3
        %s334 = smul.addr %s333, 2
        %s335 = smul.addr %s334, 8
        %s336 = scalar_lea.vmem %s5, %s335
        %v338 = vld [vmem:[%s273] sm:$0xff]
        %v339 = vld [vmem:[%s273 + $0x8] sm:$0xff]
        %v340 = vld [vmem:[%s282] sm:$0xff]
        %v341 = vld [vmem:[%s282 + $0x8] sm:$0xff]
        %v342 = vld [vmem:[%s291] sm:$0xff]
        %v343 = vld [vmem:[%s291 + $0x8] sm:$0xff]
        %v344 = vld [vmem:[%s4] sm:$0xff]
        %v345 = vpack.c.bf16 %v339, %v338
        %v346 = vld [vmem:[#allocation7] sm:$0xf]
        %v347 = vld [vmem:[#allocation7 + $0x4] sm:$0xf]
        %v348 = vld [vmem:[#allocation7 + $0x8] sm:$0xf]
        %v349 = vld [vmem:[#allocation7 + $0xc] sm:$0xf]
        %v350 = vld [vmem:[#allocation7 + $0x10] sm:$0xf]
        %v351 = vld [vmem:[#allocation7 + $0x14] sm:$0xf]
        %v352 = vld [vmem:[#allocation7 + $0x18] sm:$0xf]
        %v353 = vld [vmem:[#allocation7 + $0x1c] sm:$0xf]
        %v354 = vld [vmem:[#allocation7 + $0x20] sm:$0xf]
        %v355 = vld [vmem:[#allocation7 + $0x24] sm:$0xf]
        %v356 = vld [vmem:[#allocation7 + $0x28] sm:$0xf]
        %v357 = vld [vmem:[#allocation7 + $0x2c] sm:$0xf]
        %v358 = vld [vmem:[#allocation7 + $0x30] sm:$0xf]
        %v359 = vld [vmem:[#allocation7 + $0x34] sm:$0xf]
        %v360 = vld [vmem:[#allocation7 + $0x38] sm:$0xf]
        %v361 = vld [vmem:[#allocation7 + $0x3c] sm:$0xf]
        %v362 = vlaneseq
        %v363 = vshrl.u32 %v362, 7
        %v364 = vsub.s32 0, %v363
        %v365 = vrot.slane %v344, %v364
        %v382 = vunpack.c.l.b16 %v346
        %v383 = vunpack.c.l.b16 %v347
        %v384 = vunpack.c.l.b16 %v348
        %v385 = vunpack.c.l.b16 %v349
        %v386 = vunpack.c.l.b16 %v350
        %v387 = vunpack.c.l.b16 %v351
        %v388 = vunpack.c.l.b16 %v352
        %v389 = vunpack.c.l.b16 %v353
        %v390 = vunpack.c.l.b16 %v354
        %v391 = vunpack.c.l.b16 %v355
        %v392 = vunpack.c.l.b16 %v356
        %v393 = vunpack.c.l.b16 %v357
        %v394 = vunpack.c.l.b16 %v358
        %v395 = vunpack.c.l.b16 %v359
        %v396 = vunpack.c.l.b16 %v360
        %v397 = vunpack.c.l.b16 %v361
        %v398 = vpack.c.b16 %v383, %v382
        %v399 = vpack.c.b16 %v385, %v384
        %v400 = vpack.c.b16 %v387, %v386
        %v401 = vpack.c.b16 %v389, %v388
        %v402 = vpack.c.b16 %v391, %v390
        %v403 = vpack.c.b16 %v393, %v392
        %v404 = vpack.c.b16 %v395, %v394
        %v405 = vpack.c.b16 %v397, %v396
        %414 = vmatprep.subr.bf16.mxu0 0
        %415 = vmatpush1.bf16.msra.mxu0 %v398
        %416 = vmatprep.subr.bf16.mxu0 0
        %417 = vmatpush1.bf16.msra.mxu0 %v399
        %418 = vmatprep.subr.bf16.mxu0 0
        %419 = vmatpush1.bf16.msra.mxu0 %v400
        %420 = vmatprep.subr.bf16.mxu0 0
        %421 = vmatpush1.bf16.msra.mxu0 %v401
        %422 = vmatprep.subr.bf16.mxu0 0
        %423 = vmatpush1.bf16.msra.mxu0 %v402
        %424 = vmatprep.subr.bf16.mxu0 0
        %425 = vmatpush1.bf16.msra.mxu0 %v403
        %426 = vmatprep.subr.bf16.mxu0 0
        %427 = vmatpush1.bf16.msra.mxu0 %v404
        %428 = vmatprep.subr.bf16.mxu0 0
        %429 = vmatpush1.bf16.msra.mxu0 %v405
        %430 = vmatprep.subr.bf16.mxu0 0
        %431 = vmatpush1.bf16.msra.mxu0 0
        %432 = vmatprep.subr.bf16.mxu0 0
        %433 = vmatpush1.bf16.msra.mxu0 0
        %434 = vmatprep.subr.bf16.mxu0 0
        %435 = vmatpush1.bf16.msra.mxu0 0
        %436 = vmatprep.subr.bf16.mxu0 0
        %437 = vmatpush1.bf16.msra.mxu0 0
        %438 = vmatprep.subr.bf16.mxu0 0
        %439 = vmatpush1.bf16.msra.mxu0 0
        %440 = vmatprep.subr.bf16.mxu0 0
        %441 = vmatpush1.bf16.msra.mxu0 0
        %442 = vmatprep.subr.bf16.mxu0 0
        %443 = vmatpush1.bf16.msra.mxu0 0
        %444 = vmatprep.subr.bf16.mxu0 0
        %445 = vmatpush1.bf16.msra.mxu0 0
        %446 = vmatprep.mubr.bf16.mxu0 0
        %447 = vmatmul.mubr.bf16.gmra.mrb[0].mxu0 %v345
        %v448 = vpop.f32.mrb[0].mxu0
        %v449 = vadd.f32 %v365, %v448
        %v450 = vpop.f32.mrb[0].mxu0
        %v451 = vpop.f32.mrb[0].mxu0
        %v452 = vadd.f32 %v365, %v451
        %v453 = vpop.f32.mrb[0].mxu0
        %454 = vdwg.mxu0
        %v455 = vmax.f32 %v449, 0.0
        %v456 = vmax.f32 %v452, 0.0
        %v457 = vpack.c.bf16 %v341, %v340
        %s458 = scalar_lea.vmem [#allocation7], 64
        %v459 = vld [vmem:[%s458] sm:$0xf]
        %v460 = vld [vmem:[%s458 + $0x4] sm:$0xf]
        %v461 = vld [vmem:[%s458 + $0x8] sm:$0xf]
        %v462 = vld [vmem:[%s458 + $0xc] sm:$0xf]
        %v463 = vld [vmem:[%s458 + $0x10] sm:$0xf]
        %v464 = vld [vmem:[%s458 + $0x14] sm:$0xf]
        %v465 = vld [vmem:[%s458 + $0x18] sm:$0xf]
        %v466 = vld [vmem:[%s458 + $0x1c] sm:$0xf]
        %v467 = vld [vmem:[%s458 + $0x20] sm:$0xf]
        %v468 = vld [vmem:[%s458 + $0x24] sm:$0xf]
        %v469 = vld [vmem:[%s458 + $0x28] sm:$0xf]
        %v470 = vld [vmem:[%s458 + $0x2c] sm:$0xf]
        %v471 = vld [vmem:[%s458 + $0x30] sm:$0xf]
        %v472 = vld [vmem:[%s458 + $0x34] sm:$0xf]
        %v473 = vld [vmem:[%s458 + $0x38] sm:$0xf]
        %v474 = vld [vmem:[%s458 + $0x3c] sm:$0xf]
        %v475 = vlaneseq
        %v476 = vshrl.u32 %v475, 7
        %v477 = vsub.s32 1, %v476
        %v478 = vrot.slane %v344, %v477
        %v495 = vunpack.c.l.b16 %v459
        %v496 = vunpack.c.l.b16 %v460
        %v497 = vunpack.c.l.b16 %v461
        %v498 = vunpack.c.l.b16 %v462
        %v499 = vunpack.c.l.b16 %v463
        %v500 = vunpack.c.l.b16 %v464
        %v501 = vunpack.c.l.b16 %v465
        %v502 = vunpack.c.l.b16 %v466
        %v503 = vunpack.c.l.b16 %v467
        %v504 = vunpack.c.l.b16 %v468
        %v505 = vunpack.c.l.b16 %v469
        %v506 = vunpack.c.l.b16 %v470
        %v507 = vunpack.c.l.b16 %v471
        %v508 = vunpack.c.l.b16 %v472
        %v509 = vunpack.c.l.b16 %v473
        %v510 = vunpack.c.l.b16 %v474
        %v511 = vpack.c.b16 %v496, %v495
        %v512 = vpack.c.b16 %v498, %v497
        %v513 = vpack.c.b16 %v500, %v499
        %v514 = vpack.c.b16 %v502, %v501
        %v515 = vpack.c.b16 %v504, %v503
        %v516 = vpack.c.b16 %v506, %v505
        %v517 = vpack.c.b16 %v508, %v507
        %v518 = vpack.c.b16 %v510, %v509
        %527 = vmatprep.subr.bf16.mxu0 0
        %528 = vmatpush1.bf16.msra.mxu0 %v511
        %529 = vmatprep.subr.bf16.mxu0 0
        %530 = vmatpush1.bf16.msra.mxu0 %v512
        %531 = vmatprep.subr.bf16.mxu0 0
        %532 = vmatpush1.bf16.msra.mxu0 %v513
        %533 = vmatprep.subr.bf16.mxu0 0
        %534 = vmatpush1.bf16.msra.mxu0 %v514
        %535 = vmatprep.subr.bf16.mxu0 0
        %536 = vmatpush1.bf16.msra.mxu0 %v515
        %537 = vmatprep.subr.bf16.mxu0 0
        %538 = vmatpush1.bf16.msra.mxu0 %v516
        %539 = vmatprep.subr.bf16.mxu0 0
        %540 = vmatpush1.bf16.msra.mxu0 %v517
        %541 = vmatprep.subr.bf16.mxu0 0
        %542 = vmatpush1.bf16.msra.mxu0 %v518
        %543 = vmatprep.subr.bf16.mxu0 0
        %544 = vmatpush1.bf16.msra.mxu0 0
        %545 = vmatprep.subr.bf16.mxu0 0
        %546 = vmatpush1.bf16.msra.mxu0 0
        %547 = vmatprep.subr.bf16.mxu0 0
        %548 = vmatpush1.bf16.msra.mxu0 0
        %549 = vmatprep.subr.bf16.mxu0 0
        %550 = vmatpush1.bf16.msra.mxu0 0
        %551 = vmatprep.subr.bf16.mxu0 0
        %552 = vmatpush1.bf16.msra.mxu0 0
        %553 = vmatprep.subr.bf16.mxu0 0
        %554 = vmatpush1.bf16.msra.mxu0 0
        %555 = vmatprep.subr.bf16.mxu0 0
        %556 = vmatpush1.bf16.msra.mxu0 0
        %557 = vmatprep.subr.bf16.mxu0 0
        %558 = vmatpush1.bf16.msra.mxu0 0
        %559 = vmatprep.mubr.bf16.mxu0 0
        %560 = vmatmul.mubr.bf16.gmra.mrb[0].mxu0 %v457
        %v561 = vpop.f32.mrb[0].mxu0
        %v562 = vadd.f32 %v478, %v561
        %v563 = vpop.f32.mrb[0].mxu0
        %v564 = vpop.f32.mrb[0].mxu0
        %v565 = vadd.f32 %v478, %v564
        %v566 = vpop.f32.mrb[0].mxu0
        %567 = vdwg.mxu0
        %v568 = vmax.f32 %v562, 0.0
        %v569 = vmax.f32 %v565, 0.0
        %v570 = vpack.c.bf16 %v456, %v455
        %s571 = scalar_lea.vmem [#allocation7], 128
        %v572 = vld [vmem:[%s571] sm:$0xf]
        %v573 = vld [vmem:[%s571 + $0x4] sm:$0xf]
        %v574 = vld [vmem:[%s571 + $0x8] sm:$0xf]
        %v575 = vld [vmem:[%s571 + $0xc] sm:$0xf]
        %v576 = vld [vmem:[%s571 + $0x10] sm:$0xf]
        %v577 = vld [vmem:[%s571 + $0x14] sm:$0xf]
        %v578 = vld [vmem:[%s571 + $0x18] sm:$0xf]
        %v579 = vld [vmem:[%s571 + $0x1c] sm:$0xf]
        %v580 = vld [vmem:[%s571 + $0x20] sm:$0xf]
        %v581 = vld [vmem:[%s571 + $0x24] sm:$0xf]
        %v582 = vld [vmem:[%s571 + $0x28] sm:$0xf]
        %v583 = vld [vmem:[%s571 + $0x2c] sm:$0xf]
        %v584 = vld [vmem:[%s571 + $0x30] sm:$0xf]
        %v585 = vld [vmem:[%s571 + $0x34] sm:$0xf]
        %v586 = vld [vmem:[%s571 + $0x38] sm:$0xf]
        %v587 = vld [vmem:[%s571 + $0x3c] sm:$0xf]
        %v588 = vpack.c.bf16 %v569, %v568
        %s589 = scalar_lea.vmem [#allocation7], 192
        %v590 = vld [vmem:[%s589] sm:$0xf]
        %v591 = vld [vmem:[%s589 + $0x4] sm:$0xf]
        %v592 = vld [vmem:[%s589 + $0x8] sm:$0xf]
        %v593 = vld [vmem:[%s589 + $0xc] sm:$0xf]
        %v594 = vld [vmem:[%s589 + $0x10] sm:$0xf]
        %v595 = vld [vmem:[%s589 + $0x14] sm:$0xf]
        %v596 = vld [vmem:[%s589 + $0x18] sm:$0xf]
        %v597 = vld [vmem:[%s589 + $0x1c] sm:$0xf]
        %v598 = vld [vmem:[%s589 + $0x20] sm:$0xf]
        %v599 = vld [vmem:[%s589 + $0x24] sm:$0xf]
        %v600 = vld [vmem:[%s589 + $0x28] sm:$0xf]
        %v601 = vld [vmem:[%s589 + $0x2c] sm:$0xf]
        %v602 = vld [vmem:[%s589 + $0x30] sm:$0xf]
        %v603 = vld [vmem:[%s589 + $0x34] sm:$0xf]
        %v604 = vld [vmem:[%s589 + $0x38] sm:$0xf]
        %v605 = vld [vmem:[%s589 + $0x3c] sm:$0xf]
        %v622 = vunpack.c.l.b16 %v590
        %v623 = vunpack.c.l.b16 %v591
        %v624 = vunpack.c.l.b16 %v592
        %v625 = vunpack.c.l.b16 %v593
        %v626 = vunpack.c.l.b16 %v594
        %v627 = vunpack.c.l.b16 %v595
        %v628 = vunpack.c.l.b16 %v596
        %v629 = vunpack.c.l.b16 %v597
        %v630 = vunpack.c.l.b16 %v598
        %v631 = vunpack.c.l.b16 %v599
        %v632 = vunpack.c.l.b16 %v600
        %v633 = vunpack.c.l.b16 %v601
        %v634 = vunpack.c.l.b16 %v602
        %v635 = vunpack.c.l.b16 %v603
        %v636 = vunpack.c.l.b16 %v604
        %v637 = vunpack.c.l.b16 %v605
        %v638 = vpack.c.b16 %v623, %v622
        %v639 = vpack.c.b16 %v625, %v624
        %v640 = vpack.c.b16 %v627, %v626
        %v641 = vpack.c.b16 %v629, %v628
        %v642 = vpack.c.b16 %v631, %v630
        %v643 = vpack.c.b16 %v633, %v632
        %v644 = vpack.c.b16 %v635, %v634
        %v645 = vpack.c.b16 %v637, %v636
        %654 = vmatprep.subr.bf16.mxu0 0
        %655 = vmatpush1.bf16.msra.mxu0 %v638
        %656 = vmatprep.subr.bf16.mxu0 0
        %657 = vmatpush1.bf16.msra.mxu0 %v639
        %658 = vmatprep.subr.bf16.mxu0 0
        %659 = vmatpush1.bf16.msra.mxu0 %v640
        %660 = vmatprep.subr.bf16.mxu0 0
        %661 = vmatpush1.bf16.msra.mxu0 %v641
        %662 = vmatprep.subr.bf16.mxu0 0
        %663 = vmatpush1.bf16.msra.mxu0 %v642
        %664 = vmatprep.subr.bf16.mxu0 0
        %665 = vmatpush1.bf16.msra.mxu0 %v643
        %666 = vmatprep.subr.bf16.mxu0 0
        %667 = vmatpush1.bf16.msra.mxu0 %v644
        %668 = vmatprep.subr.bf16.mxu0 0
        %669 = vmatpush1.bf16.msra.mxu0 %v645
        %670 = vmatprep.subr.bf16.mxu0 0
        %671 = vmatpush1.bf16.msra.mxu0 0
        %672 = vmatprep.subr.bf16.mxu0 0
        %673 = vmatpush1.bf16.msra.mxu0 0
        %674 = vmatprep.subr.bf16.mxu0 0
        %675 = vmatpush1.bf16.msra.mxu0 0
        %676 = vmatprep.subr.bf16.mxu0 0
        %677 = vmatpush1.bf16.msra.mxu0 0
        %678 = vmatprep.subr.bf16.mxu0 0
        %679 = vmatpush1.bf16.msra.mxu0 0
        %680 = vmatprep.subr.bf16.mxu0 0
        %681 = vmatpush1.bf16.msra.mxu0 0
        %682 = vmatprep.subr.bf16.mxu0 0
        %683 = vmatpush1.bf16.msra.mxu0 0
        %684 = vmatprep.subr.bf16.mxu0 0
        %685 = vmatpush1.bf16.msra.mxu0 0
        %686 = vmatprep.mubr.bf16.mxu0 0
        %687 = vmatmul.mubr.bf16.gmra.mrb[0].mxu0 %v588
        %v688 = vpop.f32.mrb[0].mxu0
        %v689 = vadd.f32 0.0, %v688
        %v690 = vpop.f32.mrb[0].mxu0
        %v691 = vpop.f32.mrb[0].mxu0
        %v692 = vadd.f32 0.0, %v691
        %v693 = vpop.f32.mrb[0].mxu0
        %694 = vdwg.mxu0
        %v711 = vunpack.c.l.b16 %v572
        %v712 = vunpack.c.l.b16 %v573
        %v713 = vunpack.c.l.b16 %v574
        %v714 = vunpack.c.l.b16 %v575
        %v715 = vunpack.c.l.b16 %v576
        %v716 = vunpack.c.l.b16 %v577
        %v717 = vunpack.c.l.b16 %v578
        %v718 = vunpack.c.l.b16 %v579
        %v719 = vunpack.c.l.b16 %v580
        %v720 = vunpack.c.l.b16 %v581
        %v721 = vunpack.c.l.b16 %v582
        %v722 = vunpack.c.l.b16 %v583
        %v723 = vunpack.c.l.b16 %v584
        %v724 = vunpack.c.l.b16 %v585
        %v725 = vunpack.c.l.b16 %v586
        %v726 = vunpack.c.l.b16 %v587
        %v727 = vpack.c.b16 %v712, %v711
        %v728 = vpack.c.b16 %v714, %v713
        %v729 = vpack.c.b16 %v716, %v715
        %v730 = vpack.c.b16 %v718, %v717
        %v731 = vpack.c.b16 %v720, %v719
        %v732 = vpack.c.b16 %v722, %v721
        %v733 = vpack.c.b16 %v724, %v723
        %v734 = vpack.c.b16 %v726, %v725
        %743 = vmatprep.subr.bf16.mxu0 0
        %744 = vmatpush1.bf16.msra.mxu0 %v727
        %745 = vmatprep.subr.bf16.mxu0 0
        %746 = vmatpush1.bf16.msra.mxu0 %v728
        %747 = vmatprep.subr.bf16.mxu0 0
        %748 = vmatpush1.bf16.msra.mxu0 %v729
        %749 = vmatprep.subr.bf16.mxu0 0
        %750 = vmatpush1.bf16.msra.mxu0 %v730
        %751 = vmatprep.subr.bf16.mxu0 0
        %752 = vmatpush1.bf16.msra.mxu0 %v731
        %753 = vmatprep.subr.bf16.mxu0 0
        %754 = vmatpush1.bf16.msra.mxu0 %v732
        %755 = vmatprep.subr.bf16.mxu0 0
        %756 = vmatpush1.bf16.msra.mxu0 %v733
        %757 = vmatprep.subr.bf16.mxu0 0
        %758 = vmatpush1.bf16.msra.mxu0 %v734
        %759 = vmatprep.subr.bf16.mxu0 0
        %760 = vmatpush1.bf16.msra.mxu0 0
        %761 = vmatprep.subr.bf16.mxu0 0
        %762 = vmatpush1.bf16.msra.mxu0 0
        %763 = vmatprep.subr.bf16.mxu0 0
        %764 = vmatpush1.bf16.msra.mxu0 0
        %765 = vmatprep.subr.bf16.mxu0 0
        %766 = vmatpush1.bf16.msra.mxu0 0
        %767 = vmatprep.subr.bf16.mxu0 0
        %768 = vmatpush1.bf16.msra.mxu0 0
        %769 = vmatprep.subr.bf16.mxu0 0
        %770 = vmatpush1.bf16.msra.mxu0 0
        %771 = vmatprep.subr.bf16.mxu0 0
        %772 = vmatpush1.bf16.msra.mxu0 0
        %773 = vmatprep.subr.bf16.mxu0 0
        %774 = vmatpush1.bf16.msra.mxu0 0
        %775 = vmatprep.mubr.bf16.mxu0 0
        %776 = vmatmul.mubr.bf16.gmra.mrb[0].mxu0 %v570
        %v777 = vpop.f32.mrb[0].mxu0
        %v778 = vadd.f32 %v689, %v777
        %v779 = vpop.f32.mrb[0].mxu0
        %v780 = vpop.f32.mrb[0].mxu0
        %v781 = vadd.f32 %v692, %v780
        %v782 = vpop.f32.mrb[0].mxu0
        %783 = vdwg.mxu0
        %v784 = vlaneseq
        %v785 = vshrl.u32 %v784, 7
        %v786 = vsub.s32 2, %v785
        %v787 = vrot.slane %v344, %v786
        %v788 = vadd.f32 %v778, %v787
        %v789 = vadd.f32 %v781, %v787
        %v790 = vmax.f32 %v788, 0.0
        %v791 = vmax.f32 %v789, 0.0
        %v792 = vpack.c.bf16 %v791, %v790
        %s793 = scalar_lea.vmem [#allocation7], 256
        %v794 = vld [vmem:[%s793] sm:$0xf]
        %v795 = vld [vmem:[%s793 + $0x4] sm:$0xf]
        %v796 = vld [vmem:[%s793 + $0x8] sm:$0xf]
        %v797 = vld [vmem:[%s793 + $0xc] sm:$0xf]
        %v798 = vld [vmem:[%s793 + $0x10] sm:$0xf]
        %v799 = vld [vmem:[%s793 + $0x14] sm:$0xf]
        %v800 = vld [vmem:[%s793 + $0x18] sm:$0xf]
        %v801 = vld [vmem:[%s793 + $0x1c] sm:$0xf]
        %v802 = vld [vmem:[%s793 + $0x20] sm:$0xf]
        %v803 = vld [vmem:[%s793 + $0x24] sm:$0xf]
        %v804 = vld [vmem:[%s793 + $0x28] sm:$0xf]
        %v805 = vld [vmem:[%s793 + $0x2c] sm:$0xf]
        %v806 = vld [vmem:[%s793 + $0x30] sm:$0xf]
        %v807 = vld [vmem:[%s793 + $0x34] sm:$0xf]
        %v808 = vld [vmem:[%s793 + $0x38] sm:$0xf]
        %v809 = vld [vmem:[%s793 + $0x3c] sm:$0xf]
        %v826 = vunpack.c.l.b16 %v794
        %v827 = vunpack.c.l.b16 %v795
        %v828 = vunpack.c.l.b16 %v796
        %v829 = vunpack.c.l.b16 %v797
        %v830 = vunpack.c.l.b16 %v798
        %v831 = vunpack.c.l.b16 %v799
        %v832 = vunpack.c.l.b16 %v800
        %v833 = vunpack.c.l.b16 %v801
        %v834 = vunpack.c.l.b16 %v802
        %v835 = vunpack.c.l.b16 %v803
        %v836 = vunpack.c.l.b16 %v804
        %v837 = vunpack.c.l.b16 %v805
        %v838 = vunpack.c.l.b16 %v806
        %v839 = vunpack.c.l.b16 %v807
        %v840 = vunpack.c.l.b16 %v808
        %v841 = vunpack.c.l.b16 %v809
        %v842 = vpack.c.b16 %v827, %v826
        %v843 = vpack.c.b16 %v829, %v828
        %v844 = vpack.c.b16 %v831, %v830
        %v845 = vpack.c.b16 %v833, %v832
        %v846 = vpack.c.b16 %v835, %v834
        %v847 = vpack.c.b16 %v837, %v836
        %v848 = vpack.c.b16 %v839, %v838
        %v849 = vpack.c.b16 %v841, %v840
        %858 = vmatprep.subr.bf16.mxu0 0
        %859 = vmatpush1.bf16.msra.mxu0 %v842
        %860 = vmatprep.subr.bf16.mxu0 0
        %861 = vmatpush1.bf16.msra.mxu0 %v843
        %862 = vmatprep.subr.bf16.mxu0 0
        %863 = vmatpush1.bf16.msra.mxu0 %v844
        %864 = vmatprep.subr.bf16.mxu0 0
        %865 = vmatpush1.bf16.msra.mxu0 %v845
        %866 = vmatprep.subr.bf16.mxu0 0
        %867 = vmatpush1.bf16.msra.mxu0 %v846
        %868 = vmatprep.subr.bf16.mxu0 0
        %869 = vmatpush1.bf16.msra.mxu0 %v847
        %870 = vmatprep.subr.bf16.mxu0 0
        %871 = vmatpush1.bf16.msra.mxu0 %v848
        %872 = vmatprep.subr.bf16.mxu0 0
        %873 = vmatpush1.bf16.msra.mxu0 %v849
        %874 = vmatprep.subr.bf16.mxu0 0
        %875 = vmatpush1.bf16.msra.mxu0 0
        %876 = vmatprep.subr.bf16.mxu0 0
        %877 = vmatpush1.bf16.msra.mxu0 0
        %878 = vmatprep.subr.bf16.mxu0 0
        %879 = vmatpush1.bf16.msra.mxu0 0
        %880 = vmatprep.subr.bf16.mxu0 0
        %881 = vmatpush1.bf16.msra.mxu0 0
        %882 = vmatprep.subr.bf16.mxu0 0
        %883 = vmatpush1.bf16.msra.mxu0 0
        %884 = vmatprep.subr.bf16.mxu0 0
        %885 = vmatpush1.bf16.msra.mxu0 0
        %886 = vmatprep.subr.bf16.mxu0 0
        %887 = vmatpush1.bf16.msra.mxu0 0
        %888 = vmatprep.subr.bf16.mxu0 0
        %889 = vmatpush1.bf16.msra.mxu0 0
        %890 = vmatprep.mubr.bf16.mxu0 0
        %891 = vmatmul.mubr.bf16.gmra.mrb[0].mxu0 %v792
        %v892 = vpop.f32.mrb[0].mxu0
        %v893 = vadd.f32 0.0, %v892
        %v894 = vpop.f32.mrb[0].mxu0
        %v895 = vpop.f32.mrb[0].mxu0
        %v896 = vadd.f32 0.0, %v895
        %v897 = vpop.f32.mrb[0].mxu0
        %898 = vdwg.mxu0
        %v899 = vlaneseq
        %v900 = vshrl.u32 %v899, 7
        %v901 = vsub.s32 3, %v900
        %v902 = vrot.slane %v344, %v901
        %vm903 = vcmask 130048
        %v905 = vsel %vm903, %v342, 0
        %v908 = vsel %vm903, %v343, 0
        %910 = vmatprep.subr.mxu0 0.0
        %911 = vmatpush1.msra.mxu0 %v893
        %912 = vmatprep.subr.mxu0 0.0
        %913 = vmatpush1.msra.mxu0 %v896
        %914 = vmatprep.subr.mxu0 0.0
        %915 = vmatpush1.msra.mxu0 0.0
        %916 = vmatprep.subr.mxu0 0.0
        %917 = vmatpush1.msra.mxu0 0.0
        %918 = vmatprep.subr.mxu0 0.0
        %919 = vmatpush1.msra.mxu0 0.0
        %920 = vmatprep.subr.mxu0 0.0
        %921 = vmatpush1.msra.mxu0 0.0
        %922 = vmatprep.subr.mxu0 0.0
        %923 = vmatpush1.msra.mxu0 0.0
        %924 = vmatprep.subr.mxu0 0.0
        %925 = vmatpush1.msra.mxu0 0.0
        %926 = vmatprep.subr.mxu0 0.0
        %927 = vmatpush1.msra.mxu0 0.0
        %928 = vmatprep.subr.mxu0 0.0
        %929 = vmatpush1.msra.mxu0 0.0
        %930 = vmatprep.subr.mxu0 0.0
        %931 = vmatpush1.msra.mxu0 0.0
        %932 = vmatprep.subr.mxu0 0.0
        %933 = vmatpush1.msra.mxu0 0.0
        %934 = vmatprep.subr.mxu0 0.0
        %935 = vmatpush1.msra.mxu0 0.0
        %936 = vmatprep.subr.mxu0 0.0
        %937 = vmatpush1.msra.mxu0 0.0
        %938 = vmatprep.subr.mxu0 0.0
        %939 = vmatpush1.msra.mxu0 0.0
        %940 = vmatprep.subr.mxu0 0.0
        %941 = vmatpush1.msra.mxu0 0.0
        %942 = vmatprep.subr.mxu0 0.0
        %943 = vmatpush1.msra.mxu0 0.0
        %944 = vmatprep.subr.mxu0 0.0
        %945 = vmatpush1.msra.mxu0 0.0
        %946 = vmatprep.subr.mxu0 0.0
        %947 = vmatpush1.msra.mxu0 0.0
        %948 = vmatprep.subr.mxu0 0.0
        %949 = vmatpush1.msra.mxu0 0.0
        %950 = vmatprep.subr.mxu0 0.0
        %951 = vmatpush1.msra.mxu0 0.0
        %952 = vmatprep.subr.mxu0 0.0
        %953 = vmatpush1.msra.mxu0 0.0
        %954 = vmatprep.subr.mxu0 0.0
        %955 = vmatpush1.msra.mxu0 0.0
        %956 = vmatprep.subr.mxu0 0.0
        %957 = vmatpush1.msra.mxu0 0.0
        %958 = vmatprep.subr.mxu0 0.0
        %959 = vmatpush1.msra.mxu0 0.0
        %960 = vmatprep.subr.mxu0 0.0
        %961 = vmatpush1.msra.mxu0 0.0
        %962 = vmatprep.subr.mxu0 0.0
        %963 = vmatpush1.msra.mxu0 0.0
        %964 = vmatprep.subr.mxu0 0.0
        %965 = vmatpush1.msra.mxu0 0.0
        %966 = vmatprep.subr.mxu0 0.0
        %967 = vmatpush1.msra.mxu0 0.0
        %968 = vmatprep.subr.mxu0 0.0
        %969 = vmatpush1.msra.mxu0 0.0
        %970 = vmatprep.subr.mxu0 0.0
        %971 = vmatpush1.msra.mxu0 0.0
        %972 = vmatprep.subr.mxu0 0.0
        %973 = vmatpush1.msra.mxu0 0.0
        %974 = vmatprep.mubr.f32.mxu0 0.0
        %975 = vmatmul.mubr.f32.gmra.mrb[0].mxu0 %v905
        %v976 = vpop.f32.mrb[0].mxu0
        %v977 = vadd.f32 %v902, %v976
        %v978 = vpop.f32.mrb[0].mxu0
        %979 = vmatprep.mubr.f32.mxu0 0.0
        %980 = vmatmul.mubr.f32.gmra.mrb[0].mxu0 %v908
        %v981 = vpop.f32.mrb[0].mxu0
        %v982 = vadd.f32 %v902, %v981
        %v983 = vpop.f32.mrb[0].mxu0
        %984 = vdwg.mxu0
        %v985 = vmax.f32 %v977, 0.0
        %v986 = vmax.f32 %v982, 0.0
        %v987 = vpack.c.bf16 %v986, %v985
        %s988 = scalar_lea.vmem [#allocation7], 320
        %v989 = vld [vmem:[%s988] sm:$0xf]
        %v990 = vld [vmem:[%s988 + $0x4] sm:$0xf]
        %v991 = vld [vmem:[%s988 + $0x8] sm:$0xf]
        %v992 = vld [vmem:[%s988 + $0xc] sm:$0xf]
        %v993 = vld [vmem:[%s988 + $0x10] sm:$0xf]
        %v994 = vld [vmem:[%s988 + $0x14] sm:$0xf]
        %v995 = vld [vmem:[%s988 + $0x18] sm:$0xf]
        %v996 = vld [vmem:[%s988 + $0x1c] sm:$0xf]
        %v997 = vld [vmem:[%s988 + $0x20] sm:$0xf]
        %v998 = vld [vmem:[%s988 + $0x24] sm:$0xf]
        %v999 = vld [vmem:[%s988 + $0x28] sm:$0xf]
        %v1000 = vld [vmem:[%s988 + $0x2c] sm:$0xf]
        %v1001 = vld [vmem:[%s988 + $0x30] sm:$0xf]
        %v1002 = vld [vmem:[%s988 + $0x34] sm:$0xf]
        %v1003 = vld [vmem:[%s988 + $0x38] sm:$0xf]
        %v1004 = vld [vmem:[%s988 + $0x3c] sm:$0xf]
        %v1021 = vunpack.c.l.b16 %v989
        %v1022 = vunpack.c.l.b16 %v990
        %v1023 = vunpack.c.l.b16 %v991
        %v1024 = vunpack.c.l.b16 %v992
        %v1025 = vunpack.c.l.b16 %v993
        %v1026 = vunpack.c.l.b16 %v994
        %v1027 = vunpack.c.l.b16 %v995
        %v1028 = vunpack.c.l.b16 %v996
        %v1029 = vunpack.c.l.b16 %v997
        %v1030 = vunpack.c.l.b16 %v998
        %v1031 = vunpack.c.l.b16 %v999
        %v1032 = vunpack.c.l.b16 %v1000
        %v1033 = vunpack.c.l.b16 %v1001
        %v1034 = vunpack.c.l.b16 %v1002
        %v1035 = vunpack.c.l.b16 %v1003
        %v1036 = vunpack.c.l.b16 %v1004
        %v1037 = vpack.c.b16 %v1022, %v1021
        %v1038 = vpack.c.b16 %v1024, %v1023
        %v1039 = vpack.c.b16 %v1026, %v1025
        %v1040 = vpack.c.b16 %v1028, %v1027
        %v1041 = vpack.c.b16 %v1030, %v1029
        %v1042 = vpack.c.b16 %v1032, %v1031
        %v1043 = vpack.c.b16 %v1034, %v1033
        %v1044 = vpack.c.b16 %v1036, %v1035
        %1053 = vmatprep.subr.bf16.mxu0 0
        %1054 = vmatpush1.bf16.msra.mxu0 %v1037
        %1055 = vmatprep.subr.bf16.mxu0 0
        %1056 = vmatpush1.bf16.msra.mxu0 %v1038
        %1057 = vmatprep.subr.bf16.mxu0 0
        %1058 = vmatpush1.bf16.msra.mxu0 %v1039
        %1059 = vmatprep.subr.bf16.mxu0 0
        %1060 = vmatpush1.bf16.msra.mxu0 %v1040
        %1061 = vmatprep.subr.bf16.mxu0 0
        %1062 = vmatpush1.bf16.msra.mxu0 %v1041
        %1063 = vmatprep.subr.bf16.mxu0 0
        %1064 = vmatpush1.bf16.msra.mxu0 %v1042
        %1065 = vmatprep.subr.bf16.mxu0 0
        %1066 = vmatpush1.bf16.msra.mxu0 %v1043
        %1067 = vmatprep.subr.bf16.mxu0 0
        %1068 = vmatpush1.bf16.msra.mxu0 %v1044
        %1069 = vmatprep.subr.bf16.mxu0 0
        %1070 = vmatpush1.bf16.msra.mxu0 0
        %1071 = vmatprep.subr.bf16.mxu0 0
        %1072 = vmatpush1.bf16.msra.mxu0 0
        %1073 = vmatprep.subr.bf16.mxu0 0
        %1074 = vmatpush1.bf16.msra.mxu0 0
        %1075 = vmatprep.subr.bf16.mxu0 0
        %1076 = vmatpush1.bf16.msra.mxu0 0
        %1077 = vmatprep.subr.bf16.mxu0 0
        %1078 = vmatpush1.bf16.msra.mxu0 0
        %1079 = vmatprep.subr.bf16.mxu0 0
        %1080 = vmatpush1.bf16.msra.mxu0 0
        %1081 = vmatprep.subr.bf16.mxu0 0
        %1082 = vmatpush1.bf16.msra.mxu0 0
        %1083 = vmatprep.subr.bf16.mxu0 0
        %1084 = vmatpush1.bf16.msra.mxu0 0
        %1085 = vmatprep.mubr.bf16.mxu0 0
        %1086 = vmatmul.mubr.bf16.gmra.mrb[0].mxu0 %v987
        %v1087 = vpop.f32.mrb[0].mxu0
        %v1088 = vadd.f32 0.0, %v1087
        %v1089 = vpop.f32.mrb[0].mxu0
        %v1090 = vpop.f32.mrb[0].mxu0
        %v1091 = vadd.f32 0.0, %v1090
        %v1092 = vpop.f32.mrb[0].mxu0
        %1093 = vdwg.mxu0
        %v1094 = vlaneseq
        %v1095 = vshrl.u32 %v1094, 7
        %v1096 = vsub.s32 4, %v1095
        %v1097 = vrot.slane %v344, %v1096
        %1098 = vmatprep.subr.mxu0 0.0
        %1099 = vmatpush1.msra.mxu0 %v1088
        %1100 = vmatprep.subr.mxu0 0.0
        %1101 = vmatpush1.msra.mxu0 %v1091
        %1102 = vmatprep.subr.mxu0 0.0
        %1103 = vmatpush1.msra.mxu0 0.0
        %1104 = vmatprep.subr.mxu0 0.0
        %1105 = vmatpush1.msra.mxu0 0.0
        %1106 = vmatprep.subr.mxu0 0.0
        %1107 = vmatpush1.msra.mxu0 0.0
        %1108 = vmatprep.subr.mxu0 0.0
        %1109 = vmatpush1.msra.mxu0 0.0
        %1110 = vmatprep.subr.mxu0 0.0
        %1111 = vmatpush1.msra.mxu0 0.0
        %1112 = vmatprep.subr.mxu0 0.0
        %1113 = vmatpush1.msra.mxu0 0.0
        %1114 = vmatprep.subr.mxu0 0.0
        %1115 = vmatpush1.msra.mxu0 0.0
        %1116 = vmatprep.subr.mxu0 0.0
        %1117 = vmatpush1.msra.mxu0 0.0
        %1118 = vmatprep.subr.mxu0 0.0
        %1119 = vmatpush1.msra.mxu0 0.0
        %1120 = vmatprep.subr.mxu0 0.0
        %1121 = vmatpush1.msra.mxu0 0.0
        %1122 = vmatprep.subr.mxu0 0.0
        %1123 = vmatpush1.msra.mxu0 0.0
        %1124 = vmatprep.subr.mxu0 0.0
        %1125 = vmatpush1.msra.mxu0 0.0
        %1126 = vmatprep.subr.mxu0 0.0
        %1127 = vmatpush1.msra.mxu0 0.0
        %1128 = vmatprep.subr.mxu0 0.0
        %1129 = vmatpush1.msra.mxu0 0.0
        %1130 = vmatprep.subr.mxu0 0.0
        %1131 = vmatpush1.msra.mxu0 0.0
        %1132 = vmatprep.subr.mxu0 0.0
        %1133 = vmatpush1.msra.mxu0 0.0
        %1134 = vmatprep.subr.mxu0 0.0
        %1135 = vmatpush1.msra.mxu0 0.0
        %1136 = vmatprep.subr.mxu0 0.0
        %1137 = vmatpush1.msra.mxu0 0.0
        %1138 = vmatprep.subr.mxu0 0.0
        %1139 = vmatpush1.msra.mxu0 0.0
        %1140 = vmatprep.subr.mxu0 0.0
        %1141 = vmatpush1.msra.mxu0 0.0
        %1142 = vmatprep.subr.mxu0 0.0
        %1143 = vmatpush1.msra.mxu0 0.0
        %1144 = vmatprep.subr.mxu0 0.0
        %1145 = vmatpush1.msra.mxu0 0.0
        %1146 = vmatprep.subr.mxu0 0.0
        %1147 = vmatpush1.msra.mxu0 0.0
        %1148 = vmatprep.subr.mxu0 0.0
        %1149 = vmatpush1.msra.mxu0 0.0
        %1150 = vmatprep.subr.mxu0 0.0
        %1151 = vmatpush1.msra.mxu0 0.0
        %1152 = vmatprep.subr.mxu0 0.0
        %1153 = vmatpush1.msra.mxu0 0.0
        %1154 = vmatprep.subr.mxu0 0.0
        %1155 = vmatpush1.msra.mxu0 0.0
        %1156 = vmatprep.subr.mxu0 0.0
        %1157 = vmatpush1.msra.mxu0 0.0
        %1158 = vmatprep.subr.mxu0 0.0
        %1159 = vmatpush1.msra.mxu0 0.0
        %1160 = vmatprep.subr.mxu0 0.0
        %1161 = vmatpush1.msra.mxu0 0.0
        %1162 = vmatprep.mubr.f32.mxu0 0.0
        %1163 = vmatmul.mubr.f32.gmra.mrb[0].mxu0 %v905
        %v1164 = vpop.f32.mrb[0].mxu0
        %v1165 = vadd.f32 %v1097, %v1164
        %v1166 = vpop.f32.mrb[0].mxu0
        %1167 = vmatprep.mubr.f32.mxu0 0.0
        %1168 = vmatmul.mubr.f32.gmra.mrb[0].mxu0 %v908
        %v1169 = vpop.f32.mrb[0].mxu0
        %v1170 = vadd.f32 %v1097, %v1169
        %v1171 = vpop.f32.mrb[0].mxu0
        %1172 = vdwg.mxu0
        %v1173 = vmax.f32 %v1165, 0.0
        %v1174 = vmax.f32 %v1170, 0.0
        %v1175 = vpack.c.bf16 %v1174, %v1173
        %s1176 = scalar_lea.vmem [#allocation7], 384
        %v1177 = vld [vmem:[%s1176] sm:$0xf]
        %v1178 = vld [vmem:[%s1176 + $0x4] sm:$0xf]
        %v1179 = vld [vmem:[%s1176 + $0x8] sm:$0xf]
        %v1180 = vld [vmem:[%s1176 + $0xc] sm:$0xf]
        %v1181 = vld [vmem:[%s1176 + $0x10] sm:$0xf]
        %v1182 = vld [vmem:[%s1176 + $0x14] sm:$0xf]
        %v1183 = vld [vmem:[%s1176 + $0x18] sm:$0xf]
        %v1184 = vld [vmem:[%s1176 + $0x1c] sm:$0xf]
        %v1185 = vld [vmem:[%s1176 + $0x20] sm:$0xf]
        %v1186 = vld [vmem:[%s1176 + $0x24] sm:$0xf]
        %v1187 = vld [vmem:[%s1176 + $0x28] sm:$0xf]
        %v1188 = vld [vmem:[%s1176 + $0x2c] sm:$0xf]
        %v1189 = vld [vmem:[%s1176 + $0x30] sm:$0xf]
        %v1190 = vld [vmem:[%s1176 + $0x34] sm:$0xf]
        %v1191 = vld [vmem:[%s1176 + $0x38] sm:$0xf]
        %v1192 = vld [vmem:[%s1176 + $0x3c] sm:$0xf]
        %v1193 = vlaneseq
        %v1194 = vshrl.u32 %v1193, 7
        %v1195 = vsub.s32 5, %v1194
        %v1196 = vrot.slane %v344, %v1195
        %v1213 = vunpack.c.l.b16 %v1177
        %v1214 = vunpack.c.l.b16 %v1178
        %v1215 = vunpack.c.l.b16 %v1179
        %v1216 = vunpack.c.l.b16 %v1180
        %v1217 = vunpack.c.l.b16 %v1181
        %v1218 = vunpack.c.l.b16 %v1182
        %v1219 = vunpack.c.l.b16 %v1183
        %v1220 = vunpack.c.l.b16 %v1184
        %v1221 = vunpack.c.l.b16 %v1185
        %v1222 = vunpack.c.l.b16 %v1186
        %v1223 = vunpack.c.l.b16 %v1187
        %v1224 = vunpack.c.l.b16 %v1188
        %v1225 = vunpack.c.l.b16 %v1189
        %v1226 = vunpack.c.l.b16 %v1190
        %v1227 = vunpack.c.l.b16 %v1191
        %v1228 = vunpack.c.l.b16 %v1192
        %v1229 = vpack.c.b16 %v1214, %v1213
        %v1230 = vpack.c.b16 %v1216, %v1215
        %v1231 = vpack.c.b16 %v1218, %v1217
        %v1232 = vpack.c.b16 %v1220, %v1219
        %v1233 = vpack.c.b16 %v1222, %v1221
        %v1234 = vpack.c.b16 %v1224, %v1223
        %v1235 = vpack.c.b16 %v1226, %v1225
        %v1236 = vpack.c.b16 %v1228, %v1227
        %1245 = vmatprep.subr.bf16.mxu0 0
        %1246 = vmatpush1.bf16.msra.mxu0 %v1229
        %1247 = vmatprep.subr.bf16.mxu0 0
        %1248 = vmatpush1.bf16.msra.mxu0 %v1230
        %1249 = vmatprep.subr.bf16.mxu0 0
        %1250 = vmatpush1.bf16.msra.mxu0 %v1231
        %1251 = vmatprep.subr.bf16.mxu0 0
        %1252 = vmatpush1.bf16.msra.mxu0 %v1232
        %1253 = vmatprep.subr.bf16.mxu0 0
        %1254 = vmatpush1.bf16.msra.mxu0 %v1233
        %1255 = vmatprep.subr.bf16.mxu0 0
        %1256 = vmatpush1.bf16.msra.mxu0 %v1234
        %1257 = vmatprep.subr.bf16.mxu0 0
        %1258 = vmatpush1.bf16.msra.mxu0 %v1235
        %1259 = vmatprep.subr.bf16.mxu0 0
        %1260 = vmatpush1.bf16.msra.mxu0 %v1236
        %1261 = vmatprep.subr.bf16.mxu0 0
        %1262 = vmatpush1.bf16.msra.mxu0 0
        %1263 = vmatprep.subr.bf16.mxu0 0
        %1264 = vmatpush1.bf16.msra.mxu0 0
        %1265 = vmatprep.subr.bf16.mxu0 0
        %1266 = vmatpush1.bf16.msra.mxu0 0
        %1267 = vmatprep.subr.bf16.mxu0 0
        %1268 = vmatpush1.bf16.msra.mxu0 0
        %1269 = vmatprep.subr.bf16.mxu0 0
        %1270 = vmatpush1.bf16.msra.mxu0 0
        %1271 = vmatprep.subr.bf16.mxu0 0
        %1272 = vmatpush1.bf16.msra.mxu0 0
        %1273 = vmatprep.subr.bf16.mxu0 0
        %1274 = vmatpush1.bf16.msra.mxu0 0
        %1275 = vmatprep.subr.bf16.mxu0 0
        %1276 = vmatpush1.bf16.msra.mxu0 0
        %1277 = vmatprep.mubr.bf16.mxu0 0
        %1278 = vmatmul.mubr.bf16.gmra.mrb[0].mxu0 %v1175
        %v1279 = vpop.f32.mrb[0].mxu0
        %v1280 = vadd.f32 %v1196, %v1279
        %v1281 = vpop.f32.mrb[0].mxu0
        %v1282 = vpop.f32.mrb[0].mxu0
        %v1283 = vadd.f32 %v1196, %v1282
        %v1284 = vpop.f32.mrb[0].mxu0
        %1285 = vdwg.mxu0
        %v1286 = vmax.f32 %v1280, 0.0
        %v1287 = vmax.f32 %v1283, 0.0
        %v1288 = vpack.c.bf16 %v1287, %v1286
        %s1289 = scalar_lea.vmem [#allocation7], 448
        %v1290 = vld [vmem:[%s1289] sm:$0xf]
        %v1291 = vld [vmem:[%s1289 + $0x4] sm:$0xf]
        %v1292 = vld [vmem:[%s1289 + $0x8] sm:$0xf]
        %v1293 = vld [vmem:[%s1289 + $0xc] sm:$0xf]
        %v1294 = vld [vmem:[%s1289 + $0x10] sm:$0xf]
        %v1295 = vld [vmem:[%s1289 + $0x14] sm:$0xf]
        %v1296 = vld [vmem:[%s1289 + $0x18] sm:$0xf]
        %v1297 = vld [vmem:[%s1289 + $0x1c] sm:$0xf]
        %v1298 = vld [vmem:[%s1289 + $0x20] sm:$0xf]
        %v1299 = vld [vmem:[%s1289 + $0x24] sm:$0xf]
        %v1300 = vld [vmem:[%s1289 + $0x28] sm:$0xf]
        %v1301 = vld [vmem:[%s1289 + $0x2c] sm:$0xf]
        %v1302 = vld [vmem:[%s1289 + $0x30] sm:$0xf]
        %v1303 = vld [vmem:[%s1289 + $0x34] sm:$0xf]
        %v1304 = vld [vmem:[%s1289 + $0x38] sm:$0xf]
        %v1305 = vld [vmem:[%s1289 + $0x3c] sm:$0xf]
        %v1306 = vlaneseq
        %v1307 = vshrl.u32 %v1306, 7
        %v1308 = vsub.s32 6, %v1307
        %v1309 = vrot.slane %v344, %v1308
        %v1326 = vunpack.c.l.b16 %v1290
        %v1327 = vunpack.c.l.b16 %v1291
        %v1328 = vunpack.c.l.b16 %v1292
        %v1329 = vunpack.c.l.b16 %v1293
        %v1330 = vunpack.c.l.b16 %v1294
        %v1331 = vunpack.c.l.b16 %v1295
        %v1332 = vunpack.c.l.b16 %v1296
        %v1333 = vunpack.c.l.b16 %v1297
        %v1334 = vunpack.c.l.b16 %v1298
        %v1335 = vunpack.c.l.b16 %v1299
        %v1336 = vunpack.c.l.b16 %v1300
        %v1337 = vunpack.c.l.b16 %v1301
        %v1338 = vunpack.c.l.b16 %v1302
        %v1339 = vunpack.c.l.b16 %v1303
        %v1340 = vunpack.c.l.b16 %v1304
        %v1341 = vunpack.c.l.b16 %v1305
        %v1342 = vpack.c.b16 %v1327, %v1326
        %v1343 = vpack.c.b16 %v1329, %v1328
        %v1344 = vpack.c.b16 %v1331, %v1330
        %v1345 = vpack.c.b16 %v1333, %v1332
        %v1346 = vpack.c.b16 %v1335, %v1334
        %v1347 = vpack.c.b16 %v1337, %v1336
        %v1348 = vpack.c.b16 %v1339, %v1338
        %v1349 = vpack.c.b16 %v1341, %v1340
        %1358 = vmatprep.subr.bf16.mxu0 0
        %1359 = vmatpush1.bf16.msra.mxu0 %v1342
        %1360 = vmatprep.subr.bf16.mxu0 0
        %1361 = vmatpush1.bf16.msra.mxu0 %v1343
        %1362 = vmatprep.subr.bf16.mxu0 0
        %1363 = vmatpush1.bf16.msra.mxu0 %v1344
        %1364 = vmatprep.subr.bf16.mxu0 0
        %1365 = vmatpush1.bf16.msra.mxu0 %v1345
        %1366 = vmatprep.subr.bf16.mxu0 0
        %1367 = vmatpush1.bf16.msra.mxu0 %v1346
        %1368 = vmatprep.subr.bf16.mxu0 0
        %1369 = vmatpush1.bf16.msra.mxu0 %v1347
        %1370 = vmatprep.subr.bf16.mxu0 0
        %1371 = vmatpush1.bf16.msra.mxu0 %v1348
        %1372 = vmatprep.subr.bf16.mxu0 0
        %1373 = vmatpush1.bf16.msra.mxu0 %v1349
        %1374 = vmatprep.subr.bf16.mxu0 0
        %1375 = vmatpush1.bf16.msra.mxu0 0
        %1376 = vmatprep.subr.bf16.mxu0 0
        %1377 = vmatpush1.bf16.msra.mxu0 0
        %1378 = vmatprep.subr.bf16.mxu0 0
        %1379 = vmatpush1.bf16.msra.mxu0 0
        %1380 = vmatprep.subr.bf16.mxu0 0
        %1381 = vmatpush1.bf16.msra.mxu0 0
        %1382 = vmatprep.subr.bf16.mxu0 0
        %1383 = vmatpush1.bf16.msra.mxu0 0
        %1384 = vmatprep.subr.bf16.mxu0 0
        %1385 = vmatpush1.bf16.msra.mxu0 0
        %1386 = vmatprep.subr.bf16.mxu0 0
        %1387 = vmatpush1.bf16.msra.mxu0 0
        %1388 = vmatprep.subr.bf16.mxu0 0
        %1389 = vmatpush1.bf16.msra.mxu0 0
        %1390 = vmatprep.mubr.bf16.mxu0 0
        %1391 = vmatmul.mubr.bf16.gmra.mrb[0].mxu0 %v1288
        %v1392 = vpop.f32.mrb[0].mxu0
        %v1393 = vadd.f32 %v1309, %v1392
        %v1394 = vpop.f32.mrb[0].mxu0
        %v1395 = vpop.f32.mrb[0].mxu0
        %v1396 = vadd.f32 %v1309, %v1395
        %v1397 = vpop.f32.mrb[0].mxu0
        %1398 = vdwg.mxu0
        %1399 = vst [vmem:[%s336] sm:$0xff] %v1393
        %1400 = vst [vmem:[%s336 + $0x8] sm:$0xff] %v1396
        %p1401 = scmp.lt.s32.totalorder %s23, 3
        %s1402 = scalar_select %p1401, %s23, 3
        %s1403 = smul.addr %s1402, 2
        %s1404 = smul.addr %s1403, 8
        %s1405 = scalar_lea.vmem %s5, %s1404
        // Predicated region
        $region57: #{basegcn_pallas.1} parent=39 // pred_check
          %p1406 = pneg %p161
        $region58: #{basegcn_pallas.1} parent=39 // pred_check_branch
          %1408 = sbr.rel (%p1406) target = $region60
        $region59: #{basegcn_pallas.1} parent=39 // pred_region
          _
        $region60: #{basegcn_pallas.1} parent=39 // pred_fallthru
          _
      $region40: #{basegcn_pallas.1} parent=5 // pred_fallthru
        _
      %p1409 = scmp.le.s32.totalorder 2, %s18
      // Predicated region
      $region61: #{basegcn_pallas.1} parent=5 // pred_check
        %p1410 = pneg %p1409
      $region62: #{basegcn_pallas.1} parent=5 // pred_check_branch
        %1412 = sbr.rel (%p1410) target = $region64
      $region63: #{basegcn_pallas.1} parent=5 // pred_region
        %s1413 = ssub.s32 %s18, 2
        // Predicated region
        $region65: #{basegcn_pallas.1} parent=63 // pred_check
          %p1414 = pneg %p167
        $region66: #{basegcn_pallas.1} parent=63 // pred_check_branch
          %1416 = sbr.rel (%p1414) target = $region68
        $region67: #{basegcn_pallas.1} parent=63 // pred_region
          %p1417 = scmp.lt.s32.totalorder %s24, 3
          %s1418 = scalar_select %p1417, %s24, 3
          %s1419 = smul.addr %s1418, 2
          %s1420 = smul.addr %s1419, 8
          %s1421 = scalar_lea.vmem %s5, %s1420
        $region68: #{basegcn_pallas.1} parent=63 // pred_fallthru
          _
      $region64: #{basegcn_pallas.1} parent=5 // pred_fallthru
        _
    $region6: #{basegcn_pallas.1} parent=1 // loop_footer
      %s22 = sadd.s32 1, %s18
    $region7: #{basegcn_pallas.1} parent=1 // loop_footer_branch
      %17 = sbr.rel target = $region3
    $region8: #{basegcn_pallas.1} parent=1 // loop_exit
      _
    %1422 = vsyncpa [#allocation3], 1
    %s1423 = scalar_lea.sflag [#allocation3], 1
    %1424 = vsyncpa %s1423, 1
    %1425 = vsyncpa [#allocation5], 1
    %s1426 = scalar_lea.sflag [#allocation5], 1
    %1427 = vsyncpa %s1426, 1
    %1428 = vsyncpa [#allocation8], 1

</llo_original>
